<compile_context>
chip_gen: v7x
topology: tpu7x:2x2x1
jax: 0.10.0
libtpu: 0.0.40
codegen_flags: <defaults>
</compile_context>

<pallas_src>
import jax
import jax.numpy as jnp
from jax.experimental import pallas as pl
from jax.experimental.pallas import tpu as pltpu

REPR_DIM = 256
ACTION_DIM = 2
HIDDEN = 512
LN_EPS = 1e-5


def _layernorm_relu(h, gamma, beta):
    # One-pass stats: s1 and s2 are independent XLU reductions (they pipeline),
    # rsqrt goes to the EUP slot.
    n = h.shape[-1]
    s1 = jnp.sum(h, axis=-1, keepdims=True)
    s2 = jnp.sum(h * h, axis=-1, keepdims=True)
    mu = s1 * (1.0 / n)
    var = jnp.maximum(s2 * (1.0 / n) - mu * mu, 0.0)
    y = (h - mu) * jax.lax.rsqrt(var + LN_EPS) * gamma + beta
    return jnp.maximum(y, 0.0)


def predictor_kernel(s_ref, a_ref,
                     w1s_ref, w1a_ref, b1_ref, g1_ref, be1_ref,
                     w2_ref, b2_ref, g2_ref, be2_ref,
                     w3_ref, b3_ref,
                     o_ref):
    # ---- Layer 1: MXU over K=256 state features + 2 VPU broadcast-FMAs for
    # the action columns (replaces the padded K=258 contraction).
    s_bf16 = s_ref[...].astype(jnp.bfloat16)
    a = a_ref[...].astype(jnp.float32)          # (TB, 2), f32
    w1a = w1a_ref[...]                          # (2, 512), f32 (tiny)

    h = jnp.dot(s_bf16, w1s_ref[...], preferred_element_type=jnp.float32)
    h = h + a[:, 0:1] * w1a[0:1, :] + a[:, 1:2] * w1a[1:2, :] + b1_ref[...]
    h = _layernorm_relu(h, g1_ref[...], be1_ref[...])

    # ---- Layer 2
    h = jnp.dot(h.astype(jnp.bfloat16), w2_ref[...],
                preferred_element_type=jnp.float32) + b2_ref[...]
    h = _layernorm_relu(h, g2_ref[...], be2_ref[...])

    # ---- Output projection
    out = jnp.dot(h.astype(jnp.bfloat16), w3_ref[...],
                  preferred_element_type=jnp.float32) + b3_ref[...]
    o_ref[...] = out.astype(o_ref.dtype)


def init_params(key, repr_dim=REPR_DIM, action_dim=ACTION_DIM, hidden=HIDDEN):
    """Deterministic synthetic parameters (PyTorch-like uniform fan-in init).

    Big weight matrices are stored in bf16 (matmul operands); everything that
    feeds elementwise/LayerNorm math stays f32.
    """
    ks = jax.random.split(key, 6)
    d_in = repr_dim + action_dim

    def lin(kw, kb, fan_in, fan_out):
        bound = 1.0 / jnp.sqrt(fan_in)
        w = jax.random.uniform(kw, (fan_in, fan_out), jnp.float32, -bound, bound)
        b = jax.random.uniform(kb, (1, fan_out), jnp.float32, -bound, bound)
        return w, b

    w1, b1 = lin(ks[0], ks[1], d_in, hidden)
    w2, b2 = lin(ks[2], ks[3], hidden, hidden)
    w3, b3 = lin(ks[4], ks[5], hidden, repr_dim)

    w1_state = w1[:repr_dim].astype(jnp.bfloat16)     # (256, 512) bf16
    w1_action = w1[repr_dim:]                          # (2, 512)   f32 (tiny)
    w2 = w2.astype(jnp.bfloat16)
    w3 = w3.astype(jnp.bfloat16)

    g1 = jnp.ones((1, hidden), jnp.float32)
    be1 = jnp.zeros((1, hidden), jnp.float32)
    g2 = jnp.ones((1, hidden), jnp.float32)
    be2 = jnp.zeros((1, hidden), jnp.float32)
    return (w1_state, w1_action, b1, g1, be1, w2, b2, g2, be2, w3, b3)


def predictor_forward(state_embed, action, params, *, block_b=256):
    B = state_embed.shape[0]
    # Batch tile: 256 rows keeps the MXU busy and the activation tiles small;
    # for tiny batches a single full block (TB == B) is always legal.
    tb = block_b if B >= block_b else B
    grid = (pl.cdiv(B, tb),)

    def row_spec(feat):
        return pl.BlockSpec((tb, feat), lambda i: (i, 0))

    def const_spec(arr):
        return pl.BlockSpec(arr.shape, lambda i: (0, 0))

    in_specs = [row_spec(REPR_DIM), row_spec(ACTION_DIM)]
    in_specs += [const_spec(p) for p in params]

    flops = 2 * B * (REPR_DIM * HIDDEN + HIDDEN * HIDDEN + HIDDEN * REPR_DIM)
    param_bytes = sum(int(p.size) * p.dtype.itemsize for p in params)
    bytes_accessed = (param_bytes
                      + int(state_embed.size) * state_embed.dtype.itemsize
                      + int(action.size) * action.dtype.itemsize
                      + B * REPR_DIM * state_embed.dtype.itemsize)

    out = pl.pallas_call(
        predictor_kernel,
        grid=grid,
        out_shape=jax.ShapeDtypeStruct((B, REPR_DIM), state_embed.dtype),
        in_specs=in_specs,
        out_specs=row_spec(REPR_DIM),
        compiler_params=pltpu.CompilerParams(
            dimension_semantics=("parallel",),
            vmem_limit_bytes=16 << 20,
        ),
        cost_estimate=pl.CostEstimate(
            flops=flops,
            transcendentals=2 * B,          # two rsqrt per row
            bytes_accessed=bytes_accessed,
        ),
    )(state_embed, action, *params)
    return out


def predictor_reference(state_embed, action, params):
    (w1s, w1a, b1, g1, be1, w2, b2, g2, be2, w3, b3) = params
    w1 = jnp.concatenate([w1s.astype(jnp.float32), w1a.astype(jnp.float32)],
                         axis=0)
    x = jnp.concatenate([state_embed, action], axis=-1)

    def ln(h, g, b):
        mu = jnp.mean(h, axis=-1, keepdims=True)
        var = jnp.mean((h - mu) ** 2, axis=-1, keepdims=True)
        return (h - mu) / jnp.sqrt(var + LN_EPS) * g + b

    h = jnp.maximum(ln(x @ w1 + b1, g1, be1), 0.0)
    h = jnp.maximum(ln(h @ w2.astype(jnp.float32) + b2, g2, be2), 0.0)
    return h @ w3.astype(jnp.float32) + b3


if __name__ == "__main__":
    key = jax.random.PRNGKey(0)
    k_param, k_state, k_action = jax.random.split(key, 3)

    B = 8
    params = init_params(k_param)
    state_embed = jax.random.normal(k_state, (B, REPR_DIM), jnp.float32)
    action = jax.random.normal(k_action, (B, ACTION_DIM), jnp.float32)

    out = predictor_forward(state_embed, action, params)
    out = jax.block_until_ready(out)

    ref = predictor_reference(state_embed, action, params)
    assert out.shape == (B, REPR_DIM), out.shape
    # bf16 matmul operands (f32 accumulation) -> loosened tolerance vs f32 ref.
    assert jnp.allclose(out, ref, atol=3e-2, rtol=3e-2), "mismatch vs reference"

    print("KERNEL_OK")
</pallas_src>

<mosaic_0001>
module attributes {stable_mosaic.version = 11 : i64} {
  func.func @predictor_kernel(%arg0: i32, %arg1: memref<8x256xf32, #tpu.memory_space<vmem>>, %arg2: memref<8x2xf32, #tpu.memory_space<vmem>>, %arg3: memref<256x512xbf16, #tpu.memory_space<vmem>>, %arg4: memref<2x512xf32, #tpu.memory_space<vmem>>, %arg5: memref<1x512xf32, #tpu.memory_space<vmem>>, %arg6: memref<1x512xf32, #tpu.memory_space<vmem>>, %arg7: memref<1x512xf32, #tpu.memory_space<vmem>>, %arg8: memref<512x512xbf16, #tpu.memory_space<vmem>>, %arg9: memref<1x512xf32, #tpu.memory_space<vmem>>, %arg10: memref<1x512xf32, #tpu.memory_space<vmem>>, %arg11: memref<1x512xf32, #tpu.memory_space<vmem>>, %arg12: memref<512x256xbf16, #tpu.memory_space<vmem>>, %arg13: memref<1x256xf32, #tpu.memory_space<vmem>>, %arg14: memref<8x256xf32, #tpu.memory_space<vmem>>) attributes {dimension_semantics = [#tpu.dimension_semantics<parallel>], iteration_bounds = array<i64: 1>, scalar_prefetch = 0 : i64, scratch_operands = 0 : i64, tpu.core_type = #tpu.core_type<tc>, window_params = [{transform_indices = @transform_0, window_bounds = array<i64: 8, 256>}, {transform_indices = @transform_1, window_bounds = array<i64: 8, 2>}, {pipeline_mode = #tpu.pipeline_mode<synchronous>, transform_indices = @transform_2, window_bounds = array<i64: 256, 512>}, {pipeline_mode = #tpu.pipeline_mode<synchronous>, transform_indices = @transform_3, window_bounds = array<i64: 2, 512>}, {pipeline_mode = #tpu.pipeline_mode<synchronous>, transform_indices = @transform_4, window_bounds = array<i64: 1, 512>}, {pipeline_mode = #tpu.pipeline_mode<synchronous>, transform_indices = @transform_5, window_bounds = array<i64: 1, 512>}, {pipeline_mode = #tpu.pipeline_mode<synchronous>, transform_indices = @transform_6, window_bounds = array<i64: 1, 512>}, {pipeline_mode = #tpu.pipeline_mode<synchronous>, transform_indices = @transform_7, window_bounds = array<i64: 512, 512>}, {pipeline_mode = #tpu.pipeline_mode<synchronous>, transform_indices = @transform_8, window_bounds = array<i64: 1, 512>}, {pipeline_mode = #tpu.pipeline_mode<synchronous>, transform_indices = @transform_9, window_bounds = array<i64: 1, 512>}, {pipeline_mode = #tpu.pipeline_mode<synchronous>, transform_indices = @transform_10, window_bounds = array<i64: 1, 512>}, {pipeline_mode = #tpu.pipeline_mode<synchronous>, transform_indices = @transform_11, window_bounds = array<i64: 512, 256>}, {pipeline_mode = #tpu.pipeline_mode<synchronous>, transform_indices = @transform_12, window_bounds = array<i64: 1, 256>}, {transform_indices = @transform_13, window_bounds = array<i64: 8, 256>}]} {
    %c0 = arith.constant 0 : index
    %c0_0 = arith.constant 0 : index
    %0 = vector.load %arg1[%c0, %c0_0] : memref<8x256xf32, #tpu.memory_space<vmem>>, vector<8x256xf32>
    %1 = arith.truncf %0 : vector<8x256xf32> to vector<8x256xbf16>
    %c0_1 = arith.constant 0 : index
    %c0_2 = arith.constant 0 : index
    %2 = vector.load %arg2[%c0_1, %c0_2] : memref<8x2xf32, #tpu.memory_space<vmem>>, vector<8x2xf32>
    %c0_3 = arith.constant 0 : index
    %c0_4 = arith.constant 0 : index
    %3 = vector.load %arg4[%c0_3, %c0_4] : memref<2x512xf32, #tpu.memory_space<vmem>>, vector<2x512xf32>
    %c0_5 = arith.constant 0 : index
    %c0_6 = arith.constant 0 : index
    %4 = vector.load %arg3[%c0_5, %c0_6] : memref<256x512xbf16, #tpu.memory_space<vmem>>, vector<256x512xbf16>
    %cst = arith.constant dense<0.000000e+00> : vector<8x512xf32>
    %5 = tpu.matmul %1, %4, %cst {dimension_numbers = #tpu.dot_dimension_numbers<[1], [0], [0], [1], [0, 0, 1, 1], [], []>} : vector<8x256xbf16>, vector<256x512xbf16>, vector<8x512xf32> -> vector<8x512xf32>
    %6 = vector.extract_strided_slice %2 {offsets = [0, 0], sizes = [8, 1], strides = [1, 1]} : vector<8x2xf32> to vector<8x1xf32>
    %7 = vector.extract_strided_slice %3 {offsets = [0, 0], sizes = [1, 512], strides = [1, 1]} : vector<2x512xf32> to vector<1x512xf32>
    %8 = vector.broadcast %6 : vector<8x1xf32> to vector<8x512xf32>
    %9 = vector.broadcast %7 : vector<1x512xf32> to vector<8x512xf32>
    %10 = arith.mulf %8, %9 : vector<8x512xf32>
    %11 = arith.addf %5, %10 : vector<8x512xf32>
    %12 = vector.extract_strided_slice %2 {offsets = [0, 1], sizes = [8, 1], strides = [1, 1]} : vector<8x2xf32> to vector<8x1xf32>
    %13 = vector.extract_strided_slice %3 {offsets = [1, 0], sizes = [1, 512], strides = [1, 1]} : vector<2x512xf32> to vector<1x512xf32>
    %14 = vector.broadcast %12 : vector<8x1xf32> to vector<8x512xf32>
    %15 = vector.broadcast %13 : vector<1x512xf32> to vector<8x512xf32>
    %16 = arith.mulf %14, %15 : vector<8x512xf32>
    %17 = arith.addf %11, %16 : vector<8x512xf32>
    %c0_7 = arith.constant 0 : index
    %c0_8 = arith.constant 0 : index
    %18 = vector.load %arg5[%c0_7, %c0_8] : memref<1x512xf32, #tpu.memory_space<vmem>>, vector<1x512xf32>
    %19 = vector.broadcast %18 : vector<1x512xf32> to vector<8x512xf32>
    %20 = arith.addf %17, %19 : vector<8x512xf32>
    %c0_9 = arith.constant 0 : index
    %c0_10 = arith.constant 0 : index
    %21 = vector.load %arg6[%c0_9, %c0_10] : memref<1x512xf32, #tpu.memory_space<vmem>>, vector<1x512xf32>
    %c0_11 = arith.constant 0 : index
    %c0_12 = arith.constant 0 : index
    %22 = vector.load %arg7[%c0_11, %c0_12] : memref<1x512xf32, #tpu.memory_space<vmem>>, vector<1x512xf32>
    %cst_13 = arith.constant dense<0.000000e+00> : vector<8xf32>
    %23 = vector.multi_reduction <add>, %20, %cst_13 [1] : vector<8x512xf32> to vector<8xf32>
    %24 = vector.shape_cast %23 : vector<8xf32> to vector<8x1xf32>
    %25 = arith.mulf %20, %20 : vector<8x512xf32>
    %cst_14 = arith.constant dense<0.000000e+00> : vector<8xf32>
    %26 = vector.multi_reduction <add>, %25, %cst_14 [1] : vector<8x512xf32> to vector<8xf32>
    %27 = vector.shape_cast %26 : vector<8xf32> to vector<8x1xf32>
    %cst_15 = arith.constant 0.001953125 : f32
    %28 = vector.broadcast %cst_15 : f32 to vector<8x1xf32>
    %29 = arith.mulf %24, %28 : vector<8x1xf32>
    %cst_16 = arith.constant 0.001953125 : f32
    %30 = vector.broadcast %cst_16 : f32 to vector<8x1xf32>
    %31 = arith.mulf %27, %30 : vector<8x1xf32>
    %32 = arith.mulf %29, %29 : vector<8x1xf32>
    %33 = arith.subf %31, %32 : vector<8x1xf32>
    %cst_17 = arith.constant 0.000000e+00 : f32
    %34 = vector.broadcast %cst_17 : f32 to vector<8x1xf32>
    %35 = arith.maximumf %33, %34 : vector<8x1xf32>
    %36 = vector.broadcast %29 : vector<8x1xf32> to vector<8x512xf32>
    %37 = arith.subf %20, %36 : vector<8x512xf32>
    %cst_18 = arith.constant 9.99999974E-6 : f32
    %38 = vector.broadcast %cst_18 : f32 to vector<8x1xf32>
    %39 = arith.addf %35, %38 : vector<8x1xf32>
    %40 = math.rsqrt %39 : vector<8x1xf32>
    %41 = vector.broadcast %40 : vector<8x1xf32> to vector<8x512xf32>
    %42 = arith.mulf %37, %41 : vector<8x512xf32>
    %43 = vector.broadcast %21 : vector<1x512xf32> to vector<8x512xf32>
    %44 = arith.mulf %42, %43 : vector<8x512xf32>
    %45 = vector.broadcast %22 : vector<1x512xf32> to vector<8x512xf32>
    %46 = arith.addf %44, %45 : vector<8x512xf32>
    %cst_19 = arith.constant 0.000000e+00 : f32
    %47 = vector.broadcast %cst_19 : f32 to vector<8x512xf32>
    %48 = arith.maximumf %46, %47 : vector<8x512xf32>
    %49 = arith.truncf %48 : vector<8x512xf32> to vector<8x512xbf16>
    %c0_20 = arith.constant 0 : index
    %c0_21 = arith.constant 0 : index
    %50 = vector.load %arg8[%c0_20, %c0_21] : memref<512x512xbf16, #tpu.memory_space<vmem>>, vector<512x512xbf16>
    %cst_22 = arith.constant dense<0.000000e+00> : vector<8x512xf32>
    %51 = tpu.matmul %49, %50, %cst_22 {dimension_numbers = #tpu.dot_dimension_numbers<[1], [0], [0], [1], [0, 0, 1, 1], [], []>} : vector<8x512xbf16>, vector<512x512xbf16>, vector<8x512xf32> -> vector<8x512xf32>
    %c0_23 = arith.constant 0 : index
    %c0_24 = arith.constant 0 : index
    %52 = vector.load %arg9[%c0_23, %c0_24] : memref<1x512xf32, #tpu.memory_space<vmem>>, vector<1x512xf32>
    %53 = vector.broadcast %52 : vector<1x512xf32> to vector<8x512xf32>
    %54 = arith.addf %51, %53 : vector<8x512xf32>
    %c0_25 = arith.constant 0 : index
    %c0_26 = arith.constant 0 : index
    %55 = vector.load %arg10[%c0_25, %c0_26] : memref<1x512xf32, #tpu.memory_space<vmem>>, vector<1x512xf32>
    %c0_27 = arith.constant 0 : index
    %c0_28 = arith.constant 0 : index
    %56 = vector.load %arg11[%c0_27, %c0_28] : memref<1x512xf32, #tpu.memory_space<vmem>>, vector<1x512xf32>
    %cst_29 = arith.constant dense<0.000000e+00> : vector<8xf32>
    %57 = vector.multi_reduction <add>, %54, %cst_29 [1] : vector<8x512xf32> to vector<8xf32>
    %58 = vector.shape_cast %57 : vector<8xf32> to vector<8x1xf32>
    %59 = arith.mulf %54, %54 : vector<8x512xf32>
    %cst_30 = arith.constant dense<0.000000e+00> : vector<8xf32>
    %60 = vector.multi_reduction <add>, %59, %cst_30 [1] : vector<8x512xf32> to vector<8xf32>
    %61 = vector.shape_cast %60 : vector<8xf32> to vector<8x1xf32>
    %cst_31 = arith.constant 0.001953125 : f32
    %62 = vector.broadcast %cst_31 : f32 to vector<8x1xf32>
    %63 = arith.mulf %58, %62 : vector<8x1xf32>
    %cst_32 = arith.constant 0.001953125 : f32
    %64 = vector.broadcast %cst_32 : f32 to vector<8x1xf32>
    %65 = arith.mulf %61, %64 : vector<8x1xf32>
    %66 = arith.mulf %63, %63 : vector<8x1xf32>
    %67 = arith.subf %65, %66 : vector<8x1xf32>
    %cst_33 = arith.constant 0.000000e+00 : f32
    %68 = vector.broadcast %cst_33 : f32 to vector<8x1xf32>
    %69 = arith.maximumf %67, %68 : vector<8x1xf32>
    %70 = vector.broadcast %63 : vector<8x1xf32> to vector<8x512xf32>
    %71 = arith.subf %54, %70 : vector<8x512xf32>
    %cst_34 = arith.constant 9.99999974E-6 : f32
    %72 = vector.broadcast %cst_34 : f32 to vector<8x1xf32>
    %73 = arith.addf %69, %72 : vector<8x1xf32>
    %74 = math.rsqrt %73 : vector<8x1xf32>
    %75 = vector.broadcast %74 : vector<8x1xf32> to vector<8x512xf32>
    %76 = arith.mulf %71, %75 : vector<8x512xf32>
    %77 = vector.broadcast %55 : vector<1x512xf32> to vector<8x512xf32>
    %78 = arith.mulf %76, %77 : vector<8x512xf32>
    %79 = vector.broadcast %56 : vector<1x512xf32> to vector<8x512xf32>
    %80 = arith.addf %78, %79 : vector<8x512xf32>
    %cst_35 = arith.constant 0.000000e+00 : f32
    %81 = vector.broadcast %cst_35 : f32 to vector<8x512xf32>
    %82 = arith.maximumf %80, %81 : vector<8x512xf32>
    %83 = arith.truncf %82 : vector<8x512xf32> to vector<8x512xbf16>
    %c0_36 = arith.constant 0 : index
    %c0_37 = arith.constant 0 : index
    %84 = vector.load %arg12[%c0_36, %c0_37] : memref<512x256xbf16, #tpu.memory_space<vmem>>, vector<512x256xbf16>
    %cst_38 = arith.constant dense<0.000000e+00> : vector<8x256xf32>
    %85 = tpu.matmul %83, %84, %cst_38 {dimension_numbers = #tpu.dot_dimension_numbers<[1], [0], [0], [1], [0, 0, 1, 1], [], []>} : vector<8x512xbf16>, vector<512x256xbf16>, vector<8x256xf32> -> vector<8x256xf32>
    %c0_39 = arith.constant 0 : index
    %c0_40 = arith.constant 0 : index
    %86 = vector.load %arg13[%c0_39, %c0_40] : memref<1x256xf32, #tpu.memory_space<vmem>>, vector<1x256xf32>
    %87 = vector.broadcast %86 : vector<1x256xf32> to vector<8x256xf32>
    %88 = arith.addf %85, %87 : vector<8x256xf32>
    %c0_41 = arith.constant 0 : index
    %c0_42 = arith.constant 0 : index
    %89 = vector.load %arg14[%c0_41, %c0_42] : memref<8x256xf32, #tpu.memory_space<vmem>>, vector<8x256xf32>
    tpu.vector_store %arg14[%c0_41, %c0_42], %88 {strides = array<i32>} : memref<8x256xf32, #tpu.memory_space<vmem>>, vector<8x256xf32>,
    return
  }
  func.func @transform_0(%arg0: i32) -> (i32, i32) {
    %c0_i32 = arith.constant 0 : i32
    %c0_i32_0 = arith.constant 0 : i32
    return %arg0, %c0_i32 : i32, i32
  }
  func.func @transform_1(%arg0: i32) -> (i32, i32) {
    %c0_i32 = arith.constant 0 : i32
    %c0_i32_0 = arith.constant 0 : i32
    return %arg0, %c0_i32 : i32, i32
  }
  func.func @transform_2(%arg0: i32) -> (i32, i32) {
    %c0_i32 = arith.constant 0 : i32
    %c0_i32_0 = arith.constant 0 : i32
    %c0_i32_1 = arith.constant 0 : i32
    return %c0_i32, %c0_i32_0 : i32, i32
  }
  func.func @transform_3(%arg0: i32) -> (i32, i32) {
    %c0_i32 = arith.constant 0 : i32
    %c0_i32_0 = arith.constant 0 : i32
    %c0_i32_1 = arith.constant 0 : i32
    return %c0_i32, %c0_i32_0 : i32, i32
  }
  func.func @transform_4(%arg0: i32) -> (i32, i32) {
    %c0_i32 = arith.constant 0 : i32
    %c0_i32_0 = arith.constant 0 : i32
    %c0_i32_1 = arith.constant 0 : i32
    return %c0_i32, %c0_i32_0 : i32, i32
  }
  func.func @transform_5(%arg0: i32) -> (i32, i32) {
    %c0_i32 = arith.constant 0 : i32
    %c0_i32_0 = arith.constant 0 : i32
    %c0_i32_1 = arith.constant 0 : i32
    return %c0_i32, %c0_i32_0 : i32, i32
  }
  func.func @transform_6(%arg0: i32) -> (i32, i32) {
    %c0_i32 = arith.constant 0 : i32
    %c0_i32_0 = arith.constant 0 : i32
    %c0_i32_1 = arith.constant 0 : i32
    return %c0_i32, %c0_i32_0 : i32, i32
  }
  func.func @transform_7(%arg0: i32) -> (i32, i32) {
    %c0_i32 = arith.constant 0 : i32
    %c0_i32_0 = arith.constant 0 : i32
    %c0_i32_1 = arith.constant 0 : i32
    return %c0_i32, %c0_i32_0 : i32, i32
  }
  func.func @transform_8(%arg0: i32) -> (i32, i32) {
    %c0_i32 = arith.constant 0 : i32
    %c0_i32_0 = arith.constant 0 : i32
    %c0_i32_1 = arith.constant 0 : i32
    return %c0_i32, %c0_i32_0 : i32, i32
  }
  func.func @transform_9(%arg0: i32) -> (i32, i32) {
    %c0_i32 = arith.constant 0 : i32
    %c0_i32_0 = arith.constant 0 : i32
    %c0_i32_1 = arith.constant 0 : i32
    return %c0_i32, %c0_i32_0 : i32, i32
  }
  func.func @transform_10(%arg0: i32) -> (i32, i32) {
    %c0_i32 = arith.constant 0 : i32
    %c0_i32_0 = arith.constant 0 : i32
    %c0_i32_1 = arith.constant 0 : i32
    return %c0_i32, %c0_i32_0 : i32, i32
  }
  func.func @transform_11(%arg0: i32) -> (i32, i32) {
    %c0_i32 = arith.constant 0 : i32
    %c0_i32_0 = arith.constant 0 : i32
    %c0_i32_1 = arith.constant 0 : i32
    return %c0_i32, %c0_i32_0 : i32, i32
  }
  func.func @transform_12(%arg0: i32) -> (i32, i32) {
    %c0_i32 = arith.constant 0 : i32
    %c0_i32_0 = arith.constant 0 : i32
    %c0_i32_1 = arith.constant 0 : i32
    return %c0_i32, %c0_i32_0 : i32, i32
  }
  func.func @transform_13(%arg0: i32) -> (i32, i32) {
    %c0_i32 = arith.constant 0 : i32
    %c0_i32_0 = arith.constant 0 : i32
    return %arg0, %c0_i32 : i32, i32
  }
}

</mosaic_0001>

<llo_original>
// kernel: tpu_custom_call.1
$region0: #{tpu_custom_call.1}
  #allocation0 [shape = 'u32[]', space=smem, size = 0x4, offset = 0x4, fixed_abs, tag = 'smem constant byte address 0x4 - core index']
  #allocation1 [shape = 'u32[144,128]{1,0:T(1,128)}', space=vmem, size = 0x12000, scoped, tag = 'internal scratch']
  %s0 = inlined_call_operand.hbm [shape: f32[8,256], index: 0, kind: input, shape index: {}]
  %s1 = inlined_call_operand.vmem [shape: f32[8,2], index: 1, kind: input, shape index: {}]
  %s2 = inlined_call_operand.hbm [shape: bf16[256,512], index: 2, kind: input, shape index: {}]
  %s3 = inlined_call_operand.vmem [shape: f32[2,512], index: 3, kind: input, shape index: {}]
  %s4 = inlined_call_operand.vmem [shape: f32[1,512], index: 4, kind: input, shape index: {}]
  %s5 = inlined_call_operand.vmem [shape: f32[1,512], index: 5, kind: input, shape index: {}]
  %s6 = inlined_call_operand.vmem [shape: f32[1,512], index: 6, kind: input, shape index: {}]
  %s7 = inlined_call_operand.hbm [shape: bf16[512,512], index: 7, kind: input, shape index: {}]
  %s8 = inlined_call_operand.vmem [shape: f32[1,512], index: 8, kind: input, shape index: {}]
  %s9 = inlined_call_operand.vmem [shape: f32[1,512], index: 9, kind: input, shape index: {}]
  %s10 = inlined_call_operand.vmem [shape: f32[1,512], index: 10, kind: input, shape index: {}]
  %s11 = inlined_call_operand.hbm [shape: bf16[512,256], index: 11, kind: input, shape index: {}]
  %s12 = inlined_call_operand.vmem [shape: f32[1,256], index: 12, kind: input, shape index: {}]
  %s13 = inlined_call_operand.hbm [shape: f32[8,256], index: 13, kind: output, shape index: {}]
  %s14 = sld [smem:[#allocation0]]
  $region78: #{tpu_custom_call.1} parent=0
    _
  %s16 = ssub.s32 1, %s14
  %s17 = scalar_select 0, %s16, %s14
  $region1: #{tpu_custom_call.1} parent=0
    #allocation2 [shape = 'u8[8192]{0}', space=vmem, size = 0x2000, scoped, tag = 'input window, operand 0, single buffered']
    #allocation3 [shape = 's32[1]{0}', space=sflag, size = 0x4, scoped, tag = 'scoped memory for tpu_custom_call.1']
    #allocation4 [shape = 's32[1]{0}', space=sflag, size = 0x4, scoped, tag = 'scoped memory for tpu_custom_call.1']
    #allocation5 [shape = 'u8[262144]{0}', space=vmem, size = 0x40000, scoped, tag = 'input window, operand 2, single buffered']
    #allocation6 [shape = 's32[1]{0}', space=sflag, size = 0x4, scoped, tag = 'scoped memory for tpu_custom_call.1']
    #allocation7 [shape = 'u8[524288]{0}', space=vmem, size = 0x80000, scoped, tag = 'input window, operand 7, single buffered']
    #allocation8 [shape = 'u8[262144]{0}', space=vmem, size = 0x40000, scoped, tag = 'input window, operand 11, single buffered']
    #allocation9 [shape = 's32[1]{0}', space=sflag, size = 0x4, scoped, tag = 'scoped memory for tpu_custom_call.1']
    #allocation10 [shape = 'u8[8192]{0}', space=vmem, size = 0x2000, scoped, tag = 'output window, operand 0, single buffered']
    %18 = vsyncpa [#allocation3], 0
    %19 = vsyncpa [#allocation6], 0
    %20 = vsyncpa [#allocation9], 0
    %21 = vsyncpa [#allocation4], 0
    // Predicated region
    $region2: #{tpu_custom_call.1} parent=1 // pred_check
      _
    $region3: #{tpu_custom_call.1} parent=1 // pred_check_branch
      %23 = sbr.rel (0) target = $region5
    $region4: #{tpu_custom_call.1} parent=1 // pred_region
      %s25 = ssub.s32 256, 256
      %26 = vsyncadd [#allocation3], %s25
      %s28 = sshll.u32 [#allocation2], 4
      %s29 = int_to_ptr.vmem [resolvable:$true] %s28
      %31 = dma.hbm_to_vmem [thread:$0]  %s0, 256, %s29, [#allocation3]
    $region5: #{tpu_custom_call.1} parent=1 // pred_fallthru
      _
    // Predicated region
    $region6: #{tpu_custom_call.1} parent=1 // pred_check
      _
    $region7: #{tpu_custom_call.1} parent=1 // pred_check_branch
      %33 = sbr.rel (0) target = $region9
    $region8: #{tpu_custom_call.1} parent=1 // pred_region
      _
    $region9: #{tpu_custom_call.1} parent=1 // pred_fallthru
      _
    // Predicated region
    $region10: #{tpu_custom_call.1} parent=1 // pred_check
      _
    $region11: #{tpu_custom_call.1} parent=1 // pred_check_branch
      %35 = sbr.rel (0) target = $region13
    $region12: #{tpu_custom_call.1} parent=1 // pred_region
      %s37 = ssub.s32 8192, 8192
      %38 = vsyncadd [#allocation6], %s37
      %s39 = sshll.u32 [#allocation5], 4
      %s40 = int_to_ptr.vmem [resolvable:$true] %s39
      %45 = dma.hbm_to_vmem [thread:$0]  %s2, 8192, %s40, [#allocation6], 256, 256, 16
    $region13: #{tpu_custom_call.1} parent=1 // pred_fallthru
      _
    // Predicated region
    $region14: #{tpu_custom_call.1} parent=1 // pred_check
      _
    $region15: #{tpu_custom_call.1} parent=1 // pred_check_branch
      %47 = sbr.rel (0) target = $region17
    $region16: #{tpu_custom_call.1} parent=1 // pred_region
      _
    $region17: #{tpu_custom_call.1} parent=1 // pred_fallthru
      _
    // Predicated region
    $region18: #{tpu_custom_call.1} parent=1 // pred_check
      _
    $region19: #{tpu_custom_call.1} parent=1 // pred_check_branch
      %49 = sbr.rel (0) target = $region21
    $region20: #{tpu_custom_call.1} parent=1 // pred_region
      _
    $region21: #{tpu_custom_call.1} parent=1 // pred_fallthru
      _
    // Predicated region
    $region22: #{tpu_custom_call.1} parent=1 // pred_check
      _
    $region23: #{tpu_custom_call.1} parent=1 // pred_check_branch
      %51 = sbr.rel (0) target = $region25
    $region24: #{tpu_custom_call.1} parent=1 // pred_region
      _
    $region25: #{tpu_custom_call.1} parent=1 // pred_fallthru
      _
    // Predicated region
    $region26: #{tpu_custom_call.1} parent=1 // pred_check
      _
    $region27: #{tpu_custom_call.1} parent=1 // pred_check_branch
      %53 = sbr.rel (0) target = $region29
    $region28: #{tpu_custom_call.1} parent=1 // pred_region
      _
    $region29: #{tpu_custom_call.1} parent=1 // pred_fallthru
      _
    // Predicated region
    $region30: #{tpu_custom_call.1} parent=1 // pred_check
      _
    $region31: #{tpu_custom_call.1} parent=1 // pred_check_branch
      %55 = sbr.rel (0) target = $region33
    $region32: #{tpu_custom_call.1} parent=1 // pred_region
      %s57 = ssub.s32 16384, 16384
      %58 = vsyncadd [#allocation6], %s57
      %s59 = sshll.u32 [#allocation7], 4
      %s60 = int_to_ptr.vmem [resolvable:$true] %s59
      %65 = dma.hbm_to_vmem [thread:$0]  %s7, 16384, %s60, [#allocation6], 256, 256, 16
    $region33: #{tpu_custom_call.1} parent=1 // pred_fallthru
      _
    // Predicated region
    $region34: #{tpu_custom_call.1} parent=1 // pred_check
      _
    $region35: #{tpu_custom_call.1} parent=1 // pred_check_branch
      %67 = sbr.rel (0) target = $region37
    $region36: #{tpu_custom_call.1} parent=1 // pred_region
      _
    $region37: #{tpu_custom_call.1} parent=1 // pred_fallthru
      _
    // Predicated region
    $region38: #{tpu_custom_call.1} parent=1 // pred_check
      _
    $region39: #{tpu_custom_call.1} parent=1 // pred_check_branch
      %69 = sbr.rel (0) target = $region41
    $region40: #{tpu_custom_call.1} parent=1 // pred_region
      _
    $region41: #{tpu_custom_call.1} parent=1 // pred_fallthru
      _
    // Predicated region
    $region42: #{tpu_custom_call.1} parent=1 // pred_check
      _
    $region43: #{tpu_custom_call.1} parent=1 // pred_check_branch
      %71 = sbr.rel (0) target = $region45
    $region44: #{tpu_custom_call.1} parent=1 // pred_region
      _
    $region45: #{tpu_custom_call.1} parent=1 // pred_fallthru
      _
    // Predicated region
    $region46: #{tpu_custom_call.1} parent=1 // pred_check
      _
    $region47: #{tpu_custom_call.1} parent=1 // pred_check_branch
      %73 = sbr.rel (0) target = $region49
    $region48: #{tpu_custom_call.1} parent=1 // pred_region
      %s75 = ssub.s32 8192, 8192
      %76 = vsyncadd [#allocation9], %s75
      %s77 = sshll.u32 [#allocation8], 4
      %s78 = int_to_ptr.vmem [resolvable:$true] %s77
      %83 = dma.hbm_to_vmem [thread:$0]  %s11, 8192, %s78, [#allocation9], 128, 128, 8
    $region49: #{tpu_custom_call.1} parent=1 // pred_fallthru
      _
    // Predicated region
    $region50: #{tpu_custom_call.1} parent=1 // pred_check
      _
    $region51: #{tpu_custom_call.1} parent=1 // pred_check_branch
      %85 = sbr.rel (0) target = $region53
    $region52: #{tpu_custom_call.1} parent=1 // pred_region
      _
    $region53: #{tpu_custom_call.1} parent=1 // pred_fallthru
      _
    // Predicated region
    $region54: #{tpu_custom_call.1} parent=1 // pred_check
      _
    $region55: #{tpu_custom_call.1} parent=1 // pred_check_branch
      %87 = sbr.rel (0) target = $region57
    $region56: #{tpu_custom_call.1} parent=1 // pred_region
      %88 = dma.done [#allocation3], 256
    $region57: #{tpu_custom_call.1} parent=1 // pred_fallthru
      _
    // Predicated region
    $region58: #{tpu_custom_call.1} parent=1 // pred_check
      _
    $region59: #{tpu_custom_call.1} parent=1 // pred_check_branch
      %90 = sbr.rel (0) target = $region61
    $region60: #{tpu_custom_call.1} parent=1 // pred_region
      %91 = dma.done [#allocation6], 8192
    $region61: #{tpu_custom_call.1} parent=1 // pred_fallthru
      _
    // Predicated region
    $region62: #{tpu_custom_call.1} parent=1 // pred_check
      _
    $region63: #{tpu_custom_call.1} parent=1 // pred_check_branch
      %93 = sbr.rel (0) target = $region65
    $region64: #{tpu_custom_call.1} parent=1 // pred_region
      %94 = dma.done [#allocation6], 16384
    $region65: #{tpu_custom_call.1} parent=1 // pred_fallthru
      _
    // Predicated region
    $region66: #{tpu_custom_call.1} parent=1 // pred_check
      _
    $region67: #{tpu_custom_call.1} parent=1 // pred_check_branch
      %96 = sbr.rel (0) target = $region69
    $region68: #{tpu_custom_call.1} parent=1 // pred_region
      %97 = dma.done [#allocation9], 8192
    $region69: #{tpu_custom_call.1} parent=1 // pred_fallthru
      _
    %v98 = vld [vmem:[#allocation2] sm:$0xff]
    %v99 = vld [vmem:[#allocation2 + $0x8] sm:$0xff]
    %v100 = vpack.c.bf16 %v98, %v98
    %v101 = vpack.c.bf16 %v99, %v99
    %v102 = vld [vmem:[%s1] sm:$0xff]
    %v103 = vld [vmem:[%s3] sm:$0xff]
    %v104 = vld [vmem:[#allocation5] sm:$0xff]
    %v105 = vld [vmem:[#allocation5 + $0x8] sm:$0xff]
    %v106 = vld [vmem:[#allocation5 + $0x10] sm:$0xff]
    %v107 = vld [vmem:[#allocation5 + $0x18] sm:$0xff]
    %v108 = vld [vmem:[#allocation5 + $0x20] sm:$0xff]
    %v109 = vld [vmem:[#allocation5 + $0x28] sm:$0xff]
    %v110 = vld [vmem:[#allocation5 + $0x30] sm:$0xff]
    %v111 = vld [vmem:[#allocation5 + $0x38] sm:$0xff]
    %v112 = vld [vmem:[#allocation5 + $0x40] sm:$0xff]
    %v113 = vld [vmem:[#allocation5 + $0x48] sm:$0xff]
    %v114 = vld [vmem:[#allocation5 + $0x50] sm:$0xff]
    %v115 = vld [vmem:[#allocation5 + $0x58] sm:$0xff]
    %v116 = vld [vmem:[#allocation5 + $0x60] sm:$0xff]
    %v117 = vld [vmem:[#allocation5 + $0x68] sm:$0xff]
    %v118 = vld [vmem:[#allocation5 + $0x70] sm:$0xff]
    %v119 = vld [vmem:[#allocation5 + $0x78] sm:$0xff]
    %v120 = vld [vmem:[#allocation5 + $0x80] sm:$0xff]
    %v121 = vld [vmem:[#allocation5 + $0x88] sm:$0xff]
    %v122 = vld [vmem:[#allocation5 + $0x90] sm:$0xff]
    %v123 = vld [vmem:[#allocation5 + $0x98] sm:$0xff]
    %v124 = vld [vmem:[#allocation5 + $0xa0] sm:$0xff]
    %v125 = vld [vmem:[#allocation5 + $0xa8] sm:$0xff]
    %v126 = vld [vmem:[#allocation5 + $0xb0] sm:$0xff]
    %v127 = vld [vmem:[#allocation5 + $0xb8] sm:$0xff]
    %v128 = vld [vmem:[#allocation5 + $0xc0] sm:$0xff]
    %v129 = vld [vmem:[#allocation5 + $0xc8] sm:$0xff]
    %v130 = vld [vmem:[#allocation5 + $0xd0] sm:$0xff]
    %v131 = vld [vmem:[#allocation5 + $0xd8] sm:$0xff]
    %v132 = vld [vmem:[#allocation5 + $0xe0] sm:$0xff]
    %v133 = vld [vmem:[#allocation5 + $0xe8] sm:$0xff]
    %v134 = vld [vmem:[#allocation5 + $0xf0] sm:$0xff]
    %v135 = vld [vmem:[#allocation5 + $0xf8] sm:$0xff]
    %v136 = vld [vmem:[#allocation5 + $0x100] sm:$0xff]
    %v137 = vld [vmem:[#allocation5 + $0x108] sm:$0xff]
    %v138 = vld [vmem:[#allocation5 + $0x110] sm:$0xff]
    %v139 = vld [vmem:[#allocation5 + $0x118] sm:$0xff]
    %v140 = vld [vmem:[#allocation5 + $0x120] sm:$0xff]
    %v141 = vld [vmem:[#allocation5 + $0x128] sm:$0xff]
    %v142 = vld [vmem:[#allocation5 + $0x130] sm:$0xff]
    %v143 = vld [vmem:[#allocation5 + $0x138] sm:$0xff]
    %v144 = vld [vmem:[#allocation5 + $0x140] sm:$0xff]
    %v145 = vld [vmem:[#allocation5 + $0x148] sm:$0xff]
    %v146 = vld [vmem:[#allocation5 + $0x150] sm:$0xff]
    %v147 = vld [vmem:[#allocation5 + $0x158] sm:$0xff]
    %v148 = vld [vmem:[#allocation5 + $0x160] sm:$0xff]
    %v149 = vld [vmem:[#allocation5 + $0x168] sm:$0xff]
    %v150 = vld [vmem:[#allocation5 + $0x170] sm:$0xff]
    %v151 = vld [vmem:[#allocation5 + $0x178] sm:$0xff]
    %v152 = vld [vmem:[#allocation5 + $0x180] sm:$0xff]
    %v153 = vld [vmem:[#allocation5 + $0x188] sm:$0xff]
    %v154 = vld [vmem:[#allocation5 + $0x190] sm:$0xff]
    %v155 = vld [vmem:[#allocation5 + $0x198] sm:$0xff]
    %v156 = vld [vmem:[#allocation5 + $0x1a0] sm:$0xff]
    %v157 = vld [vmem:[#allocation5 + $0x1a8] sm:$0xff]
    %v158 = vld [vmem:[#allocation5 + $0x1b0] sm:$0xff]
    %v159 = vld [vmem:[#allocation5 + $0x1b8] sm:$0xff]
    %v160 = vld [vmem:[#allocation5 + $0x1c0] sm:$0xff]
    %v161 = vld [vmem:[#allocation5 + $0x1c8] sm:$0xff]
    %v162 = vld [vmem:[#allocation5 + $0x1d0] sm:$0xff]
    %v163 = vld [vmem:[#allocation5 + $0x1d8] sm:$0xff]
    %v164 = vld [vmem:[#allocation5 + $0x1e0] sm:$0xff]
    %v165 = vld [vmem:[#allocation5 + $0x1e8] sm:$0xff]
    %v166 = vld [vmem:[#allocation5 + $0x1f0] sm:$0xff]
    %v167 = vld [vmem:[#allocation5 + $0x1f8] sm:$0xff]
    %169 = vset.pattern.permute.xlu0 0
    %170 = vperm.xlu0 %169, %v102
    %v171 = vpop.permute.xlu0 %170
    %v174 = vlaneseq
    %v175 = vshrl.u32 %v174, 7
    %v176 = vsub.s32 0, %v175
    %v177 = vrot.slane %v103, %v176
    %v178 = vlaneseq
    %v179 = vshrl.u32 %v178, 7
    %v180 = vsub.s32 2, %v179
    %v181 = vrot.slane %v103, %v180
    %v182 = vlaneseq
    %v183 = vshrl.u32 %v182, 7
    %v184 = vsub.s32 4, %v183
    %v185 = vrot.slane %v103, %v184
    %v186 = vlaneseq
    %v187 = vshrl.u32 %v186, 7
    %v188 = vsub.s32 6, %v187
    %v189 = vrot.slane %v103, %v188
    %v194 = vlaneseq
    %v195 = vshrl.u32 %v194, 7
    %v196 = vsub.s32 0, %v195
    %v197 = vrot.slane %v177, %v196
    %v198 = vlaneseq
    %v199 = vshrl.u32 %v198, 7
    %v200 = vsub.s32 0, %v199
    %v201 = vrot.slane %v181, %v200
    %v202 = vlaneseq
    %v203 = vshrl.u32 %v202, 7
    %v204 = vsub.s32 0, %v203
    %v205 = vrot.slane %v185, %v204
    %v206 = vlaneseq
    %v207 = vshrl.u32 %v206, 7
    %v208 = vsub.s32 0, %v207
    %v209 = vrot.slane %v189, %v208
    %v210 = vmul.f32 %v171, %v197
    %v211 = vmul.f32 %v171, %v201
    %v212 = vmul.f32 %v171, %v205
    %v213 = vmul.f32 %v171, %v209
    %v278 = vunpack.c.l.b16 %v104
    %v279 = vunpack.c.h.b16 %v104
    %v280 = vunpack.c.l.b16 %v105
    %v281 = vunpack.c.h.b16 %v105
    %v282 = vunpack.c.l.b16 %v106
    %v283 = vunpack.c.h.b16 %v106
    %v284 = vunpack.c.l.b16 %v107
    %v285 = vunpack.c.h.b16 %v107
    %v286 = vunpack.c.l.b16 %v108
    %v287 = vunpack.c.h.b16 %v108
    %v288 = vunpack.c.l.b16 %v109
    %v289 = vunpack.c.h.b16 %v109
    %v290 = vunpack.c.l.b16 %v110
    %v291 = vunpack.c.h.b16 %v110
    %v292 = vunpack.c.l.b16 %v111
    %v293 = vunpack.c.h.b16 %v111
    %v294 = vunpack.c.l.b16 %v112
    %v295 = vunpack.c.h.b16 %v112
    %v296 = vunpack.c.l.b16 %v113
    %v297 = vunpack.c.h.b16 %v113
    %v298 = vunpack.c.l.b16 %v114
    %v299 = vunpack.c.h.b16 %v114
    %v300 = vunpack.c.l.b16 %v115
    %v301 = vunpack.c.h.b16 %v115
    %v302 = vunpack.c.l.b16 %v116
    %v303 = vunpack.c.h.b16 %v116
    %v304 = vunpack.c.l.b16 %v117
    %v305 = vunpack.c.h.b16 %v117
    %v306 = vunpack.c.l.b16 %v118
    %v307 = vunpack.c.h.b16 %v118
    %v308 = vunpack.c.l.b16 %v119
    %v309 = vunpack.c.h.b16 %v119
    %v310 = vunpack.c.l.b16 %v120
    %v311 = vunpack.c.h.b16 %v120
    %v312 = vunpack.c.l.b16 %v121
    %v313 = vunpack.c.h.b16 %v121
    %v314 = vunpack.c.l.b16 %v122
    %v315 = vunpack.c.h.b16 %v122
    %v316 = vunpack.c.l.b16 %v123
    %v317 = vunpack.c.h.b16 %v123
    %v318 = vunpack.c.l.b16 %v124
    %v319 = vunpack.c.h.b16 %v124
    %v320 = vunpack.c.l.b16 %v125
    %v321 = vunpack.c.h.b16 %v125
    %v322 = vunpack.c.l.b16 %v126
    %v323 = vunpack.c.h.b16 %v126
    %v324 = vunpack.c.l.b16 %v127
    %v325 = vunpack.c.h.b16 %v127
    %v326 = vunpack.c.l.b16 %v128
    %v327 = vunpack.c.h.b16 %v128
    %v328 = vunpack.c.l.b16 %v129
    %v329 = vunpack.c.h.b16 %v129
    %v330 = vunpack.c.l.b16 %v130
    %v331 = vunpack.c.h.b16 %v130
    %v332 = vunpack.c.l.b16 %v131
    %v333 = vunpack.c.h.b16 %v131
    %v334 = vunpack.c.l.b16 %v132
    %v335 = vunpack.c.h.b16 %v132
    %v336 = vunpack.c.l.b16 %v133
    %v337 = vunpack.c.h.b16 %v133
    %v338 = vunpack.c.l.b16 %v134
    %v339 = vunpack.c.h.b16 %v134
    %v340 = vunpack.c.l.b16 %v135
    %v341 = vunpack.c.h.b16 %v135
    %v342 = vunpack.c.l.b16 %v136
    %v343 = vunpack.c.h.b16 %v136
    %v344 = vunpack.c.l.b16 %v137
    %v345 = vunpack.c.h.b16 %v137
    %v346 = vunpack.c.l.b16 %v138
    %v347 = vunpack.c.h.b16 %v138
    %v348 = vunpack.c.l.b16 %v139
    %v349 = vunpack.c.h.b16 %v139
    %v350 = vunpack.c.l.b16 %v140
    %v351 = vunpack.c.h.b16 %v140
    %v352 = vunpack.c.l.b16 %v141
    %v353 = vunpack.c.h.b16 %v141
    %v354 = vunpack.c.l.b16 %v142
    %v355 = vunpack.c.h.b16 %v142
    %v356 = vunpack.c.l.b16 %v143
    %v357 = vunpack.c.h.b16 %v143
    %v358 = vunpack.c.l.b16 %v144
    %v359 = vunpack.c.h.b16 %v144
    %v360 = vunpack.c.l.b16 %v145
    %v361 = vunpack.c.h.b16 %v145
    %v362 = vunpack.c.l.b16 %v146
    %v363 = vunpack.c.h.b16 %v146
    %v364 = vunpack.c.l.b16 %v147
    %v365 = vunpack.c.h.b16 %v147
    %v366 = vunpack.c.l.b16 %v148
    %v367 = vunpack.c.h.b16 %v148
    %v368 = vunpack.c.l.b16 %v149
    %v369 = vunpack.c.h.b16 %v149
    %v370 = vunpack.c.l.b16 %v150
    %v371 = vunpack.c.h.b16 %v150
    %v372 = vunpack.c.l.b16 %v151
    %v373 = vunpack.c.h.b16 %v151
    %v374 = vunpack.c.l.b16 %v152
    %v375 = vunpack.c.h.b16 %v152
    %v376 = vunpack.c.l.b16 %v153
    %v377 = vunpack.c.h.b16 %v153
    %v378 = vunpack.c.l.b16 %v154
    %v379 = vunpack.c.h.b16 %v154
    %v380 = vunpack.c.l.b16 %v155
    %v381 = vunpack.c.h.b16 %v155
    %v382 = vunpack.c.l.b16 %v156
    %v383 = vunpack.c.h.b16 %v156
    %v384 = vunpack.c.l.b16 %v157
    %v385 = vunpack.c.h.b16 %v157
    %v386 = vunpack.c.l.b16 %v158
    %v387 = vunpack.c.h.b16 %v158
    %v388 = vunpack.c.l.b16 %v159
    %v389 = vunpack.c.h.b16 %v159
    %v390 = vunpack.c.l.b16 %v160
    %v391 = vunpack.c.h.b16 %v160
    %v392 = vunpack.c.l.b16 %v161
    %v393 = vunpack.c.h.b16 %v161
    %v394 = vunpack.c.l.b16 %v162
    %v395 = vunpack.c.h.b16 %v162
    %v396 = vunpack.c.l.b16 %v163
    %v397 = vunpack.c.h.b16 %v163
    %v398 = vunpack.c.l.b16 %v164
    %v399 = vunpack.c.h.b16 %v164
    %v400 = vunpack.c.l.b16 %v165
    %v401 = vunpack.c.h.b16 %v165
    %v402 = vunpack.c.l.b16 %v166
    %v403 = vunpack.c.h.b16 %v166
    %v404 = vunpack.c.l.b16 %v167
    %v405 = vunpack.c.h.b16 %v167
    %v406 = vpack.c.b16 %v282, %v278
    %v407 = vpack.c.b16 %v283, %v279
    %v408 = vpack.c.b16 %v284, %v280
    %v409 = vpack.c.b16 %v285, %v281
    %v410 = vpack.c.b16 %v290, %v286
    %v411 = vpack.c.b16 %v291, %v287
    %v412 = vpack.c.b16 %v292, %v288
    %v413 = vpack.c.b16 %v293, %v289
    %v414 = vpack.c.b16 %v298, %v294
    %v415 = vpack.c.b16 %v299, %v295
    %v416 = vpack.c.b16 %v300, %v296
    %v417 = vpack.c.b16 %v301, %v297
    %v418 = vpack.c.b16 %v306, %v302
    %v419 = vpack.c.b16 %v307, %v303
    %v420 = vpack.c.b16 %v308, %v304
    %v421 = vpack.c.b16 %v309, %v305
    %v422 = vpack.c.b16 %v314, %v310
    %v423 = vpack.c.b16 %v315, %v311
    %v424 = vpack.c.b16 %v316, %v312
    %v425 = vpack.c.b16 %v317, %v313
    %v426 = vpack.c.b16 %v322, %v318
    %v427 = vpack.c.b16 %v323, %v319
    %v428 = vpack.c.b16 %v324, %v320
    %v429 = vpack.c.b16 %v325, %v321
    %v430 = vpack.c.b16 %v330, %v326
    %v431 = vpack.c.b16 %v331, %v327
    %v432 = vpack.c.b16 %v332, %v328
    %v433 = vpack.c.b16 %v333, %v329
    %v434 = vpack.c.b16 %v338, %v334
    %v435 = vpack.c.b16 %v339, %v335
    %v436 = vpack.c.b16 %v340, %v336
    %v437 = vpack.c.b16 %v341, %v337
    %v438 = vpack.c.b16 %v346, %v342
    %v439 = vpack.c.b16 %v347, %v343
    %v440 = vpack.c.b16 %v348, %v344
    %v441 = vpack.c.b16 %v349, %v345
    %v442 = vpack.c.b16 %v354, %v350
    %v443 = vpack.c.b16 %v355, %v351
    %v444 = vpack.c.b16 %v356, %v352
    %v445 = vpack.c.b16 %v357, %v353
    %v446 = vpack.c.b16 %v362, %v358
    %v447 = vpack.c.b16 %v363, %v359
    %v448 = vpack.c.b16 %v364, %v360
    %v449 = vpack.c.b16 %v365, %v361
    %v450 = vpack.c.b16 %v370, %v366
    %v451 = vpack.c.b16 %v371, %v367
    %v452 = vpack.c.b16 %v372, %v368
    %v453 = vpack.c.b16 %v373, %v369
    %v454 = vpack.c.b16 %v378, %v374
    %v455 = vpack.c.b16 %v379, %v375
    %v456 = vpack.c.b16 %v380, %v376
    %v457 = vpack.c.b16 %v381, %v377
    %v458 = vpack.c.b16 %v386, %v382
    %v459 = vpack.c.b16 %v387, %v383
    %v460 = vpack.c.b16 %v388, %v384
    %v461 = vpack.c.b16 %v389, %v385
    %v462 = vpack.c.b16 %v394, %v390
    %v463 = vpack.c.b16 %v395, %v391
    %v464 = vpack.c.b16 %v396, %v392
    %v465 = vpack.c.b16 %v397, %v393
    %v466 = vpack.c.b16 %v402, %v398
    %v467 = vpack.c.b16 %v403, %v399
    %v468 = vpack.c.b16 %v404, %v400
    %v469 = vpack.c.b16 %v405, %v401
    %534 = vmatprep.subr.bf16.mxu0 %v407
    %535 = vmatpush1.bf16.msra.mxu0 %v406
    %536 = vmatprep.subr.bf16.mxu0 %v411
    %537 = vmatpush1.bf16.msra.mxu0 %v410
    %538 = vmatprep.subr.bf16.mxu0 %v415
    %539 = vmatpush1.bf16.msra.mxu0 %v414
    %540 = vmatprep.subr.bf16.mxu0 %v419
    %541 = vmatpush1.bf16.msra.mxu0 %v418
    %542 = vmatprep.subr.bf16.mxu0 %v423
    %543 = vmatpush1.bf16.msra.mxu0 %v422
    %544 = vmatprep.subr.bf16.mxu0 %v427
    %545 = vmatpush1.bf16.msra.mxu0 %v426
    %546 = vmatprep.subr.bf16.mxu0 %v431
    %547 = vmatpush1.bf16.msra.mxu0 %v430
    %548 = vmatprep.subr.bf16.mxu0 %v435
    %549 = vmatpush1.bf16.msra.mxu0 %v434
    %550 = vmatprep.subr.bf16.mxu0 %v439
    %551 = vmatpush1.bf16.msra.mxu0 %v438
    %552 = vmatprep.subr.bf16.mxu0 %v443
    %553 = vmatpush1.bf16.msra.mxu0 %v442
    %554 = vmatprep.subr.bf16.mxu0 %v447
    %555 = vmatpush1.bf16.msra.mxu0 %v446
    %556 = vmatprep.subr.bf16.mxu0 %v451
    %557 = vmatpush1.bf16.msra.mxu0 %v450
    %558 = vmatprep.subr.bf16.mxu0 %v455
    %559 = vmatpush1.bf16.msra.mxu0 %v454
    %560 = vmatprep.subr.bf16.mxu0 %v459
    %561 = vmatpush1.bf16.msra.mxu0 %v458
    %562 = vmatprep.subr.bf16.mxu0 %v463
    %563 = vmatpush1.bf16.msra.mxu0 %v462
    %564 = vmatprep.subr.bf16.mxu0 %v467
    %565 = vmatpush1.bf16.msra.mxu0 %v466
    %566 = vmatprep.mubr.bf16.mxu0 %v101
    %567 = vmatmul.mubr.bf16.gmra.mrb[0].mxu0 %v100
    %v568 = vpop.f32.mrb[0].mxu0
    %v569 = vadd.f32 %v210, %v568
    %v570 = vpop.f32.mrb[0].mxu0
    %v571 = vadd.f32 %v211, %v570
    %v572 = vpop.f32.mrb[0].mxu0
    %v573 = vpop.f32.mrb[0].mxu0
    %574 = vdwg.mxu0
    %575 = vmatprep.subr.bf16.mxu0 %v409
    %576 = vmatpush1.bf16.msra.mxu0 %v408
    %577 = vmatprep.subr.bf16.mxu0 %v413
    %578 = vmatpush1.bf16.msra.mxu0 %v412
    %579 = vmatprep.subr.bf16.mxu0 %v417
    %580 = vmatpush1.bf16.msra.mxu0 %v416
    %581 = vmatprep.subr.bf16.mxu0 %v421
    %582 = vmatpush1.bf16.msra.mxu0 %v420
    %583 = vmatprep.subr.bf16.mxu0 %v425
    %584 = vmatpush1.bf16.msra.mxu0 %v424
    %585 = vmatprep.subr.bf16.mxu0 %v429
    %586 = vmatpush1.bf16.msra.mxu0 %v428
    %587 = vmatprep.subr.bf16.mxu0 %v433
    %588 = vmatpush1.bf16.msra.mxu0 %v432
    %589 = vmatprep.subr.bf16.mxu0 %v437
    %590 = vmatpush1.bf16.msra.mxu0 %v436
    %591 = vmatprep.subr.bf16.mxu0 %v441
    %592 = vmatpush1.bf16.msra.mxu0 %v440
    %593 = vmatprep.subr.bf16.mxu0 %v445
    %594 = vmatpush1.bf16.msra.mxu0 %v444
    %595 = vmatprep.subr.bf16.mxu0 %v449
    %596 = vmatpush1.bf16.msra.mxu0 %v448
    %597 = vmatprep.subr.bf16.mxu0 %v453
    %598 = vmatpush1.bf16.msra.mxu0 %v452
    %599 = vmatprep.subr.bf16.mxu0 %v457
    %600 = vmatpush1.bf16.msra.mxu0 %v456
    %601 = vmatprep.subr.bf16.mxu0 %v461
    %602 = vmatpush1.bf16.msra.mxu0 %v460
    %603 = vmatprep.subr.bf16.mxu0 %v465
    %604 = vmatpush1.bf16.msra.mxu0 %v464
    %605 = vmatprep.subr.bf16.mxu0 %v469
    %606 = vmatpush1.bf16.msra.mxu0 %v468
    %607 = vmatprep.mubr.bf16.mxu0 %v101
    %608 = vmatmul.mubr.bf16.gmra.mrb[0].mxu0 %v100
    %v609 = vpop.f32.mrb[0].mxu0
    %v610 = vadd.f32 %v212, %v609
    %v611 = vpop.f32.mrb[0].mxu0
    %v612 = vadd.f32 %v213, %v611
    %v613 = vpop.f32.mrb[0].mxu0
    %v614 = vpop.f32.mrb[0].mxu0
    %615 = vdwg.mxu0
    %616 = vset.pattern.permute.xlu0 1
    %617 = vperm.xlu0 %616, %v102
    %v618 = vpop.permute.xlu0 %617
    %v620 = vlaneseq
    %v621 = vshrl.u32 %v620, 7
    %v622 = vsub.s32 1, %v621
    %v623 = vrot.slane %v103, %v622
    %v624 = vlaneseq
    %v625 = vshrl.u32 %v624, 7
    %v626 = vsub.s32 3, %v625
    %v627 = vrot.slane %v103, %v626
    %v628 = vlaneseq
    %v629 = vshrl.u32 %v628, 7
    %v630 = vsub.s32 5, %v629
    %v631 = vrot.slane %v103, %v630
    %v632 = vlaneseq
    %v633 = vshrl.u32 %v632, 7
    %v634 = vsub.s32 7, %v633
    %v635 = vrot.slane %v103, %v634
    %v640 = vlaneseq
    %v641 = vshrl.u32 %v640, 7
    %v642 = vsub.s32 1, %v641
    %v643 = vrot.slane %v623, %v642
    %v644 = vlaneseq
    %v645 = vshrl.u32 %v644, 7
    %v646 = vsub.s32 1, %v645
    %v647 = vrot.slane %v627, %v646
    %v648 = vlaneseq
    %v649 = vshrl.u32 %v648, 7
    %v650 = vsub.s32 1, %v649
    %v651 = vrot.slane %v631, %v650
    %v652 = vlaneseq
    %v653 = vshrl.u32 %v652, 7
    %v654 = vsub.s32 1, %v653
    %v655 = vrot.slane %v635, %v654
    %v656 = vmul.f32 %v618, %v643
    %v657 = vmul.f32 %v618, %v647
    %v658 = vmul.f32 %v618, %v651
    %v659 = vmul.f32 %v618, %v655
    %v660 = vadd.f32 %v569, %v656
    %v661 = vadd.f32 %v571, %v657
    %v662 = vadd.f32 %v610, %v658
    %v663 = vadd.f32 %v612, %v659
    %v664 = vld [vmem:[%s4] sm:$0xf]
    %v666 = vlaneseq
    %v667 = vshrl.u32 %v666, 7
    %v668 = vsub.s32 0, %v667
    %v669 = vrot.slane %v664, %v668
    %v670 = vlaneseq
    %v671 = vshrl.u32 %v670, 7
    %v672 = vsub.s32 1, %v671
    %v673 = vrot.slane %v664, %v672
    %v674 = vlaneseq
    %v675 = vshrl.u32 %v674, 7
    %v676 = vsub.s32 2, %v675
    %v677 = vrot.slane %v664, %v676
    %v678 = vlaneseq
    %v679 = vshrl.u32 %v678, 7
    %v680 = vsub.s32 3, %v679
    %v681 = vrot.slane %v664, %v680
    %v686 = vadd.f32 %v660, %v669
    %v687 = vadd.f32 %v661, %v673
    %v688 = vadd.f32 %v662, %v677
    %v689 = vadd.f32 %v663, %v681
    %v690 = vld [vmem:[%s5] sm:$0xf]
    %v691 = vld [vmem:[%s6] sm:$0xf]
    %v692 = vadd.f32 %v686, %v687
    %v693 = vadd.f32 %v692, %v688
    %v694 = vadd.f32 %v693, %v689
    %695 = vadd.xlane.f32.xlu0 %v694
    %v696 = vpop.xlane.xlu0 %695
    %v697 = vmul.f32 %v686, %v686
    %v698 = vmul.f32 %v687, %v687
    %v699 = vmul.f32 %v688, %v688
    %v700 = vmul.f32 %v689, %v689
    %v701 = vadd.f32 %v697, %v698
    %v702 = vadd.f32 %v701, %v699
    %v703 = vadd.f32 %v702, %v700
    %704 = vadd.xlane.f32.xlu0 %v703
    %v705 = vpop.xlane.xlu0 %704
    %v706 = vmul.f32 %v696, 0.001953125
    %v707 = vmul.f32 %v705, 0.001953125
    %v708 = vmul.f32 %v706, %v706
    %v709 = vsub.f32 %v707, %v708
    %v710 = vmax.f32 %v709, 0.0
    %v711 = vsub.f32 %v686, %v706
    %v712 = vsub.f32 %v687, %v706
    %v713 = vsub.f32 %v688, %v706
    %v714 = vsub.f32 %v689, %v706
    %v715 = vadd.f32 %v710, 1e-05
    %v716 = vrsqrt.pop %v715
    %v717 = vmul.f32 %v711, %v716
    %v718 = vmul.f32 %v712, %v716
    %v719 = vmul.f32 %v713, %v716
    %v720 = vmul.f32 %v714, %v716
    %v722 = vlaneseq
    %v723 = vshrl.u32 %v722, 7
    %v724 = vsub.s32 0, %v723
    %v725 = vrot.slane %v690, %v724
    %v726 = vlaneseq
    %v727 = vshrl.u32 %v726, 7
    %v728 = vsub.s32 1, %v727
    %v729 = vrot.slane %v690, %v728
    %v730 = vlaneseq
    %v731 = vshrl.u32 %v730, 7
    %v732 = vsub.s32 2, %v731
    %v733 = vrot.slane %v690, %v732
    %v734 = vlaneseq
    %v735 = vshrl.u32 %v734, 7
    %v736 = vsub.s32 3, %v735
    %v737 = vrot.slane %v690, %v736
    %v742 = vmul.f32 %v717, %v725
    %v743 = vmul.f32 %v718, %v729
    %v744 = vmul.f32 %v719, %v733
    %v745 = vmul.f32 %v720, %v737
    %v747 = vlaneseq
    %v748 = vshrl.u32 %v747, 7
    %v749 = vsub.s32 0, %v748
    %v750 = vrot.slane %v691, %v749
    %v751 = vlaneseq
    %v752 = vshrl.u32 %v751, 7
    %v753 = vsub.s32 1, %v752
    %v754 = vrot.slane %v691, %v753
    %v755 = vlaneseq
    %v756 = vshrl.u32 %v755, 7
    %v757 = vsub.s32 2, %v756
    %v758 = vrot.slane %v691, %v757
    %v759 = vlaneseq
    %v760 = vshrl.u32 %v759, 7
    %v761 = vsub.s32 3, %v760
    %v762 = vrot.slane %v691, %v761
    %v767 = vadd.f32 %v742, %v750
    %v768 = vadd.f32 %v743, %v754
    %v769 = vadd.f32 %v744, %v758
    %v770 = vadd.f32 %v745, %v762
    %v771 = vmax.f32 %v767, 0.0
    %v772 = vmax.f32 %v768, 0.0
    %v773 = vmax.f32 %v769, 0.0
    %v774 = vmax.f32 %v770, 0.0
    %v775 = vpack.c.bf16 %v771, %v771
    %v776 = vpack.c.bf16 %v772, %v772
    %v777 = vpack.c.bf16 %v773, %v773
    %v778 = vpack.c.bf16 %v774, %v774
    %v779 = vld [vmem:[#allocation7] sm:$0xff]
    %v780 = vld [vmem:[#allocation7 + $0x8] sm:$0xff]
    %v781 = vld [vmem:[#allocation7 + $0x10] sm:$0xff]
    %v782 = vld [vmem:[#allocation7 + $0x18] sm:$0xff]
    %v783 = vld [vmem:[#allocation7 + $0x20] sm:$0xff]
    %v784 = vld [vmem:[#allocation7 + $0x28] sm:$0xff]
    %v785 = vld [vmem:[#allocation7 + $0x30] sm:$0xff]
    %v786 = vld [vmem:[#allocation7 + $0x38] sm:$0xff]
    %v787 = vld [vmem:[#allocation7 + $0x40] sm:$0xff]
    %v788 = vld [vmem:[#allocation7 + $0x48] sm:$0xff]
    %v789 = vld [vmem:[#allocation7 + $0x50] sm:$0xff]
    %v790 = vld [vmem:[#allocation7 + $0x58] sm:$0xff]
    %v791 = vld [vmem:[#allocation7 + $0x60] sm:$0xff]
    %v792 = vld [vmem:[#allocation7 + $0x68] sm:$0xff]
    %v793 = vld [vmem:[#allocation7 + $0x70] sm:$0xff]
    %v794 = vld [vmem:[#allocation7 + $0x78] sm:$0xff]
    %v795 = vld [vmem:[#allocation7 + $0x80] sm:$0xff]
    %v796 = vld [vmem:[#allocation7 + $0x88] sm:$0xff]
    %v797 = vld [vmem:[#allocation7 + $0x90] sm:$0xff]
    %v798 = vld [vmem:[#allocation7 + $0x98] sm:$0xff]
    %v799 = vld [vmem:[#allocation7 + $0xa0] sm:$0xff]
    %v800 = vld [vmem:[#allocation7 + $0xa8] sm:$0xff]
    %v801 = vld [vmem:[#allocation7 + $0xb0] sm:$0xff]
    %v802 = vld [vmem:[#allocation7 + $0xb8] sm:$0xff]
    %v803 = vld [vmem:[#allocation7 + $0xc0] sm:$0xff]
    %v804 = vld [vmem:[#allocation7 + $0xc8] sm:$0xff]
    %v805 = vld [vmem:[#allocation7 + $0xd0] sm:$0xff]
    %v806 = vld [vmem:[#allocation7 + $0xd8] sm:$0xff]
    %v807 = vld [vmem:[#allocation7 + $0xe0] sm:$0xff]
    %v808 = vld [vmem:[#allocation7 + $0xe8] sm:$0xff]
    %v809 = vld [vmem:[#allocation7 + $0xf0] sm:$0xff]
    %v810 = vld [vmem:[#allocation7 + $0xf8] sm:$0xff]
    %v811 = vld [vmem:[#allocation7 + $0x100] sm:$0xff]
    %v812 = vld [vmem:[#allocation7 + $0x108] sm:$0xff]
    %v813 = vld [vmem:[#allocation7 + $0x110] sm:$0xff]
    %v814 = vld [vmem:[#allocation7 + $0x118] sm:$0xff]
    %v815 = vld [vmem:[#allocation7 + $0x120] sm:$0xff]
    %v816 = vld [vmem:[#allocation7 + $0x128] sm:$0xff]
    %v817 = vld [vmem:[#allocation7 + $0x130] sm:$0xff]
    %v818 = vld [vmem:[#allocation7 + $0x138] sm:$0xff]
    %v819 = vld [vmem:[#allocation7 + $0x140] sm:$0xff]
    %v820 = vld [vmem:[#allocation7 + $0x148] sm:$0xff]
    %v821 = vld [vmem:[#allocation7 + $0x150] sm:$0xff]
    %v822 = vld [vmem:[#allocation7 + $0x158] sm:$0xff]
    %v823 = vld [vmem:[#allocation7 + $0x160] sm:$0xff]
    %v824 = vld [vmem:[#allocation7 + $0x168] sm:$0xff]
    %v825 = vld [vmem:[#allocation7 + $0x170] sm:$0xff]
    %v826 = vld [vmem:[#allocation7 + $0x178] sm:$0xff]
    %v827 = vld [vmem:[#allocation7 + $0x180] sm:$0xff]
    %v828 = vld [vmem:[#allocation7 + $0x188] sm:$0xff]
    %v829 = vld [vmem:[#allocation7 + $0x190] sm:$0xff]
    %v830 = vld [vmem:[#allocation7 + $0x198] sm:$0xff]
    %v831 = vld [vmem:[#allocation7 + $0x1a0] sm:$0xff]
    %v832 = vld [vmem:[#allocation7 + $0x1a8] sm:$0xff]
    %v833 = vld [vmem:[#allocation7 + $0x1b0] sm:$0xff]
    %v834 = vld [vmem:[#allocation7 + $0x1b8] sm:$0xff]
    %v835 = vld [vmem:[#allocation7 + $0x1c0] sm:$0xff]
    %v836 = vld [vmem:[#allocation7 + $0x1c8] sm:$0xff]
    %v837 = vld [vmem:[#allocation7 + $0x1d0] sm:$0xff]
    %v838 = vld [vmem:[#allocation7 + $0x1d8] sm:$0xff]
    %v839 = vld [vmem:[#allocation7 + $0x1e0] sm:$0xff]
    %v840 = vld [vmem:[#allocation7 + $0x1e8] sm:$0xff]
    %v841 = vld [vmem:[#allocation7 + $0x1f0] sm:$0xff]
    %v842 = vld [vmem:[#allocation7 + $0x1f8] sm:$0xff]
    %v843 = vld [vmem:[#allocation7 + $0x200] sm:$0xff]
    %v844 = vld [vmem:[#allocation7 + $0x208] sm:$0xff]
    %v845 = vld [vmem:[#allocation7 + $0x210] sm:$0xff]
    %v846 = vld [vmem:[#allocation7 + $0x218] sm:$0xff]
    %v847 = vld [vmem:[#allocation7 + $0x220] sm:$0xff]
    %v848 = vld [vmem:[#allocation7 + $0x228] sm:$0xff]
    %v849 = vld [vmem:[#allocation7 + $0x230] sm:$0xff]
    %v850 = vld [vmem:[#allocation7 + $0x238] sm:$0xff]
    %v851 = vld [vmem:[#allocation7 + $0x240] sm:$0xff]
    %v852 = vld [vmem:[#allocation7 + $0x248] sm:$0xff]
    %v853 = vld [vmem:[#allocation7 + $0x250] sm:$0xff]
    %v854 = vld [vmem:[#allocation7 + $0x258] sm:$0xff]
    %v855 = vld [vmem:[#allocation7 + $0x260] sm:$0xff]
    %v856 = vld [vmem:[#allocation7 + $0x268] sm:$0xff]
    %v857 = vld [vmem:[#allocation7 + $0x270] sm:$0xff]
    %v858 = vld [vmem:[#allocation7 + $0x278] sm:$0xff]
    %v859 = vld [vmem:[#allocation7 + $0x280] sm:$0xff]
    %v860 = vld [vmem:[#allocation7 + $0x288] sm:$0xff]
    %v861 = vld [vmem:[#allocation7 + $0x290] sm:$0xff]
    %v862 = vld [vmem:[#allocation7 + $0x298] sm:$0xff]
    %v863 = vld [vmem:[#allocation7 + $0x2a0] sm:$0xff]
    %v864 = vld [vmem:[#allocation7 + $0x2a8] sm:$0xff]
    %v865 = vld [vmem:[#allocation7 + $0x2b0] sm:$0xff]
    %v866 = vld [vmem:[#allocation7 + $0x2b8] sm:$0xff]
    %v867 = vld [vmem:[#allocation7 + $0x2c0] sm:$0xff]
    %v868 = vld [vmem:[#allocation7 + $0x2c8] sm:$0xff]
    %v869 = vld [vmem:[#allocation7 + $0x2d0] sm:$0xff]
    %v870 = vld [vmem:[#allocation7 + $0x2d8] sm:$0xff]
    %v871 = vld [vmem:[#allocation7 + $0x2e0] sm:$0xff]
    %v872 = vld [vmem:[#allocation7 + $0x2e8] sm:$0xff]
    %v873 = vld [vmem:[#allocation7 + $0x2f0] sm:$0xff]
    %v874 = vld [vmem:[#allocation7 + $0x2f8] sm:$0xff]
    %v875 = vld [vmem:[#allocation7 + $0x300] sm:$0xff]
    %v876 = vld [vmem:[#allocation7 + $0x308] sm:$0xff]
    %v877 = vld [vmem:[#allocation7 + $0x310] sm:$0xff]
    %v878 = vld [vmem:[#allocation7 + $0x318] sm:$0xff]
    %v879 = vld [vmem:[#allocation7 + $0x320] sm:$0xff]
    %v880 = vld [vmem:[#allocation7 + $0x328] sm:$0xff]
    %v881 = vld [vmem:[#allocation7 + $0x330] sm:$0xff]
    %v882 = vld [vmem:[#allocation7 + $0x338] sm:$0xff]
    %v883 = vld [vmem:[#allocation7 + $0x340] sm:$0xff]
    %v884 = vld [vmem:[#allocation7 + $0x348] sm:$0xff]
    %v885 = vld [vmem:[#allocation7 + $0x350] sm:$0xff]
    %v886 = vld [vmem:[#allocation7 + $0x358] sm:$0xff]
    %v887 = vld [vmem:[#allocation7 + $0x360] sm:$0xff]
    %v888 = vld [vmem:[#allocation7 + $0x368] sm:$0xff]
    %v889 = vld [vmem:[#allocation7 + $0x370] sm:$0xff]
    %v890 = vld [vmem:[#allocation7 + $0x378] sm:$0xff]
    %v891 = vld [vmem:[#allocation7 + $0x380] sm:$0xff]
    %v892 = vld [vmem:[#allocation7 + $0x388] sm:$0xff]
    %v893 = vld [vmem:[#allocation7 + $0x390] sm:$0xff]
    %v894 = vld [vmem:[#allocation7 + $0x398] sm:$0xff]
    %v895 = vld [vmem:[#allocation7 + $0x3a0] sm:$0xff]
    %v896 = vld [vmem:[#allocation7 + $0x3a8] sm:$0xff]
    %v897 = vld [vmem:[#allocation7 + $0x3b0] sm:$0xff]
    %v898 = vld [vmem:[#allocation7 + $0x3b8] sm:$0xff]
    %v899 = vld [vmem:[#allocation7 + $0x3c0] sm:$0xff]
    %v900 = vld [vmem:[#allocation7 + $0x3c8] sm:$0xff]
    %v901 = vld [vmem:[#allocation7 + $0x3d0] sm:$0xff]
    %v902 = vld [vmem:[#allocation7 + $0x3d8] sm:$0xff]
    %v903 = vld [vmem:[#allocation7 + $0x3e0] sm:$0xff]
    %v904 = vld [vmem:[#allocation7 + $0x3e8] sm:$0xff]
    %v905 = vld [vmem:[#allocation7 + $0x3f0] sm:$0xff]
    %v906 = vld [vmem:[#allocation7 + $0x3f8] sm:$0xff]
    %v907 = vld [vmem:[%s8] sm:$0xf]
    %v909 = vlaneseq
    %v910 = vshrl.u32 %v909, 7
    %v911 = vsub.s32 0, %v910
    %v912 = vrot.slane %v907, %v911
    %v913 = vlaneseq
    %v914 = vshrl.u32 %v913, 7
    %v915 = vsub.s32 1, %v914
    %v916 = vrot.slane %v907, %v915
    %v917 = vlaneseq
    %v918 = vshrl.u32 %v917, 7
    %v919 = vsub.s32 2, %v918
    %v920 = vrot.slane %v907, %v919
    %v921 = vlaneseq
    %v922 = vshrl.u32 %v921, 7
    %v923 = vsub.s32 3, %v922
    %v924 = vrot.slane %v907, %v923
    %v1057 = vunpack.c.l.b16 %v779
    %v1058 = vunpack.c.h.b16 %v779
    %v1059 = vunpack.c.l.b16 %v780
    %v1060 = vunpack.c.h.b16 %v780
    %v1061 = vunpack.c.l.b16 %v781
    %v1062 = vunpack.c.h.b16 %v781
    %v1063 = vunpack.c.l.b16 %v782
    %v1064 = vunpack.c.h.b16 %v782
    %v1065 = vunpack.c.l.b16 %v783
    %v1066 = vunpack.c.h.b16 %v783
    %v1067 = vunpack.c.l.b16 %v784
    %v1068 = vunpack.c.h.b16 %v784
    %v1069 = vunpack.c.l.b16 %v785
    %v1070 = vunpack.c.h.b16 %v785
    %v1071 = vunpack.c.l.b16 %v786
    %v1072 = vunpack.c.h.b16 %v786
    %v1073 = vunpack.c.l.b16 %v787
    %v1074 = vunpack.c.h.b16 %v787
    %v1075 = vunpack.c.l.b16 %v788
    %v1076 = vunpack.c.h.b16 %v788
    %v1077 = vunpack.c.l.b16 %v789
    %v1078 = vunpack.c.h.b16 %v789
    %v1079 = vunpack.c.l.b16 %v790
    %v1080 = vunpack.c.h.b16 %v790
    %v1081 = vunpack.c.l.b16 %v791
    %v1082 = vunpack.c.h.b16 %v791
    %v1083 = vunpack.c.l.b16 %v792
    %v1084 = vunpack.c.h.b16 %v792
    %v1085 = vunpack.c.l.b16 %v793
    %v1086 = vunpack.c.h.b16 %v793
    %v1087 = vunpack.c.l.b16 %v794
    %v1088 = vunpack.c.h.b16 %v794
    %v1089 = vunpack.c.l.b16 %v795
    %v1090 = vunpack.c.h.b16 %v795
    %v1091 = vunpack.c.l.b16 %v796
    %v1092 = vunpack.c.h.b16 %v796
    %v1093 = vunpack.c.l.b16 %v797
    %v1094 = vunpack.c.h.b16 %v797
    %v1095 = vunpack.c.l.b16 %v798
    %v1096 = vunpack.c.h.b16 %v798
    %v1097 = vunpack.c.l.b16 %v799
    %v1098 = vunpack.c.h.b16 %v799
    %v1099 = vunpack.c.l.b16 %v800
    %v1100 = vunpack.c.h.b16 %v800
    %v1101 = vunpack.c.l.b16 %v801
    %v1102 = vunpack.c.h.b16 %v801
    %v1103 = vunpack.c.l.b16 %v802
    %v1104 = vunpack.c.h.b16 %v802
    %v1105 = vunpack.c.l.b16 %v803
    %v1106 = vunpack.c.h.b16 %v803
    %v1107 = vunpack.c.l.b16 %v804
    %v1108 = vunpack.c.h.b16 %v804
    %v1109 = vunpack.c.l.b16 %v805
    %v1110 = vunpack.c.h.b16 %v805
    %v1111 = vunpack.c.l.b16 %v806
    %v1112 = vunpack.c.h.b16 %v806
    %v1113 = vunpack.c.l.b16 %v807
    %v1114 = vunpack.c.h.b16 %v807
    %v1115 = vunpack.c.l.b16 %v808
    %v1116 = vunpack.c.h.b16 %v808
    %v1117 = vunpack.c.l.b16 %v809
    %v1118 = vunpack.c.h.b16 %v809
    %v1119 = vunpack.c.l.b16 %v810
    %v1120 = vunpack.c.h.b16 %v810
    %v1121 = vunpack.c.l.b16 %v811
    %v1122 = vunpack.c.h.b16 %v811
    %v1123 = vunpack.c.l.b16 %v812
    %v1124 = vunpack.c.h.b16 %v812
    %v1125 = vunpack.c.l.b16 %v813
    %v1126 = vunpack.c.h.b16 %v813
    %v1127 = vunpack.c.l.b16 %v814
    %v1128 = vunpack.c.h.b16 %v814
    %v1129 = vunpack.c.l.b16 %v815
    %v1130 = vunpack.c.h.b16 %v815
    %v1131 = vunpack.c.l.b16 %v816
    %v1132 = vunpack.c.h.b16 %v816
    %v1133 = vunpack.c.l.b16 %v817
    %v1134 = vunpack.c.h.b16 %v817
    %v1135 = vunpack.c.l.b16 %v818
    %v1136 = vunpack.c.h.b16 %v818
    %v1137 = vunpack.c.l.b16 %v819
    %v1138 = vunpack.c.h.b16 %v819
    %v1139 = vunpack.c.l.b16 %v820
    %v1140 = vunpack.c.h.b16 %v820
    %v1141 = vunpack.c.l.b16 %v821
    %v1142 = vunpack.c.h.b16 %v821
    %v1143 = vunpack.c.l.b16 %v822
    %v1144 = vunpack.c.h.b16 %v822
    %v1145 = vunpack.c.l.b16 %v823
    %v1146 = vunpack.c.h.b16 %v823
    %v1147 = vunpack.c.l.b16 %v824
    %v1148 = vunpack.c.h.b16 %v824
    %v1149 = vunpack.c.l.b16 %v825
    %v1150 = vunpack.c.h.b16 %v825
    %v1151 = vunpack.c.l.b16 %v826
    %v1152 = vunpack.c.h.b16 %v826
    %v1153 = vunpack.c.l.b16 %v827
    %v1154 = vunpack.c.h.b16 %v827
    %v1155 = vunpack.c.l.b16 %v828
    %v1156 = vunpack.c.h.b16 %v828
    %v1157 = vunpack.c.l.b16 %v829
    %v1158 = vunpack.c.h.b16 %v829
    %v1159 = vunpack.c.l.b16 %v830
    %v1160 = vunpack.c.h.b16 %v830
    %v1161 = vunpack.c.l.b16 %v831
    %v1162 = vunpack.c.h.b16 %v831
    %v1163 = vunpack.c.l.b16 %v832
    %v1164 = vunpack.c.h.b16 %v832
    %v1165 = vunpack.c.l.b16 %v833
    %v1166 = vunpack.c.h.b16 %v833
    %v1167 = vunpack.c.l.b16 %v834
    %v1168 = vunpack.c.h.b16 %v834
    %v1169 = vunpack.c.l.b16 %v835
    %v1170 = vunpack.c.h.b16 %v835
    %v1171 = vunpack.c.l.b16 %v836
    %v1172 = vunpack.c.h.b16 %v836
    %v1173 = vunpack.c.l.b16 %v837
    %v1174 = vunpack.c.h.b16 %v837
    %v1175 = vunpack.c.l.b16 %v838
    %v1176 = vunpack.c.h.b16 %v838
    %v1177 = vunpack.c.l.b16 %v839
    %v1178 = vunpack.c.h.b16 %v839
    %v1179 = vunpack.c.l.b16 %v840
    %v1180 = vunpack.c.h.b16 %v840
    %v1181 = vunpack.c.l.b16 %v841
    %v1182 = vunpack.c.h.b16 %v841
    %v1183 = vunpack.c.l.b16 %v842
    %v1184 = vunpack.c.h.b16 %v842
    %v1185 = vunpack.c.l.b16 %v843
    %v1186 = vunpack.c.h.b16 %v843
    %v1187 = vunpack.c.l.b16 %v844
    %v1188 = vunpack.c.h.b16 %v844
    %v1189 = vunpack.c.l.b16 %v845
    %v1190 = vunpack.c.h.b16 %v845
    %v1191 = vunpack.c.l.b16 %v846
    %v1192 = vunpack.c.h.b16 %v846
    %v1193 = vunpack.c.l.b16 %v847
    %v1194 = vunpack.c.h.b16 %v847
    %v1195 = vunpack.c.l.b16 %v848
    %v1196 = vunpack.c.h.b16 %v848
    %v1197 = vunpack.c.l.b16 %v849
    %v1198 = vunpack.c.h.b16 %v849
    %v1199 = vunpack.c.l.b16 %v850
    %v1200 = vunpack.c.h.b16 %v850
    %v1201 = vunpack.c.l.b16 %v851
    %v1202 = vunpack.c.h.b16 %v851
    %v1203 = vunpack.c.l.b16 %v852
    %v1204 = vunpack.c.h.b16 %v852
    %v1205 = vunpack.c.l.b16 %v853
    %v1206 = vunpack.c.h.b16 %v853
    %v1207 = vunpack.c.l.b16 %v854
    %v1208 = vunpack.c.h.b16 %v854
    %v1209 = vunpack.c.l.b16 %v855
    %v1210 = vunpack.c.h.b16 %v855
    %v1211 = vunpack.c.l.b16 %v856
    %v1212 = vunpack.c.h.b16 %v856
    %v1213 = vunpack.c.l.b16 %v857
    %v1214 = vunpack.c.h.b16 %v857
    %v1215 = vunpack.c.l.b16 %v858
    %v1216 = vunpack.c.h.b16 %v858
    %v1217 = vunpack.c.l.b16 %v859
    %v1218 = vunpack.c.h.b16 %v859
    %v1219 = vunpack.c.l.b16 %v860
    %v1220 = vunpack.c.h.b16 %v860
    %v1221 = vunpack.c.l.b16 %v861
    %v1222 = vunpack.c.h.b16 %v861
    %v1223 = vunpack.c.l.b16 %v862
    %v1224 = vunpack.c.h.b16 %v862
    %v1225 = vunpack.c.l.b16 %v863
    %v1226 = vunpack.c.h.b16 %v863
    %v1227 = vunpack.c.l.b16 %v864
    %v1228 = vunpack.c.h.b16 %v864
    %v1229 = vunpack.c.l.b16 %v865
    %v1230 = vunpack.c.h.b16 %v865
    %v1231 = vunpack.c.l.b16 %v866
    %v1232 = vunpack.c.h.b16 %v866
    %v1233 = vunpack.c.l.b16 %v867
    %v1234 = vunpack.c.h.b16 %v867
    %v1235 = vunpack.c.l.b16 %v868
    %v1236 = vunpack.c.h.b16 %v868
    %v1237 = vunpack.c.l.b16 %v869
    %v1238 = vunpack.c.h.b16 %v869
    %v1239 = vunpack.c.l.b16 %v870
    %v1240 = vunpack.c.h.b16 %v870
    %v1241 = vunpack.c.l.b16 %v871
    %v1242 = vunpack.c.h.b16 %v871
    %v1243 = vunpack.c.l.b16 %v872
    %v1244 = vunpack.c.h.b16 %v872
    %v1245 = vunpack.c.l.b16 %v873
    %v1246 = vunpack.c.h.b16 %v873
    %v1247 = vunpack.c.l.b16 %v874
    %v1248 = vunpack.c.h.b16 %v874
    %v1249 = vunpack.c.l.b16 %v875
    %v1250 = vunpack.c.h.b16 %v875
    %v1251 = vunpack.c.l.b16 %v876
    %v1252 = vunpack.c.h.b16 %v876
    %v1253 = vunpack.c.l.b16 %v877
    %v1254 = vunpack.c.h.b16 %v877
    %v1255 = vunpack.c.l.b16 %v878
    %v1256 = vunpack.c.h.b16 %v878
    %v1257 = vunpack.c.l.b16 %v879
    %v1258 = vunpack.c.h.b16 %v879
    %v1259 = vunpack.c.l.b16 %v880
    %v1260 = vunpack.c.h.b16 %v880
    %v1261 = vunpack.c.l.b16 %v881
    %v1262 = vunpack.c.h.b16 %v881
    %v1263 = vunpack.c.l.b16 %v882
    %v1264 = vunpack.c.h.b16 %v882
    %v1265 = vunpack.c.l.b16 %v883
    %v1266 = vunpack.c.h.b16 %v883
    %v1267 = vunpack.c.l.b16 %v884
    %v1268 = vunpack.c.h.b16 %v884
    %v1269 = vunpack.c.l.b16 %v885
    %v1270 = vunpack.c.h.b16 %v885
    %v1271 = vunpack.c.l.b16 %v886
    %v1272 = vunpack.c.h.b16 %v886
    %v1273 = vunpack.c.l.b16 %v887
    %v1274 = vunpack.c.h.b16 %v887
    %v1275 = vunpack.c.l.b16 %v888
    %v1276 = vunpack.c.h.b16 %v888
    %v1277 = vunpack.c.l.b16 %v889
    %v1278 = vunpack.c.h.b16 %v889
    %v1279 = vunpack.c.l.b16 %v890
    %v1280 = vunpack.c.h.b16 %v890
    %v1281 = vunpack.c.l.b16 %v891
    %v1282 = vunpack.c.h.b16 %v891
    %v1283 = vunpack.c.l.b16 %v892
    %v1284 = vunpack.c.h.b16 %v892
    %v1285 = vunpack.c.l.b16 %v893
    %v1286 = vunpack.c.h.b16 %v893
    %v1287 = vunpack.c.l.b16 %v894
    %v1288 = vunpack.c.h.b16 %v894
    %v1289 = vunpack.c.l.b16 %v895
    %v1290 = vunpack.c.h.b16 %v895
    %v1291 = vunpack.c.l.b16 %v896
    %v1292 = vunpack.c.h.b16 %v896
    %v1293 = vunpack.c.l.b16 %v897
    %v1294 = vunpack.c.h.b16 %v897
    %v1295 = vunpack.c.l.b16 %v898
    %v1296 = vunpack.c.h.b16 %v898
    %v1297 = vunpack.c.l.b16 %v899
    %v1298 = vunpack.c.h.b16 %v899
    %v1299 = vunpack.c.l.b16 %v900
    %v1300 = vunpack.c.h.b16 %v900
    %v1301 = vunpack.c.l.b16 %v901
    %v1302 = vunpack.c.h.b16 %v901
    %v1303 = vunpack.c.l.b16 %v902
    %v1304 = vunpack.c.h.b16 %v902
    %v1305 = vunpack.c.l.b16 %v903
    %v1306 = vunpack.c.h.b16 %v903
    %v1307 = vunpack.c.l.b16 %v904
    %v1308 = vunpack.c.h.b16 %v904
    %v1309 = vunpack.c.l.b16 %v905
    %v1310 = vunpack.c.h.b16 %v905
    %v1311 = vunpack.c.l.b16 %v906
    %v1312 = vunpack.c.h.b16 %v906
    %v1313 = vpack.c.b16 %v1061, %v1057
    %v1314 = vpack.c.b16 %v1062, %v1058
    %v1315 = vpack.c.b16 %v1063, %v1059
    %v1316 = vpack.c.b16 %v1064, %v1060
    %v1317 = vpack.c.b16 %v1069, %v1065
    %v1318 = vpack.c.b16 %v1070, %v1066
    %v1319 = vpack.c.b16 %v1071, %v1067
    %v1320 = vpack.c.b16 %v1072, %v1068
    %v1321 = vpack.c.b16 %v1077, %v1073
    %v1322 = vpack.c.b16 %v1078, %v1074
    %v1323 = vpack.c.b16 %v1079, %v1075
    %v1324 = vpack.c.b16 %v1080, %v1076
    %v1325 = vpack.c.b16 %v1085, %v1081
    %v1326 = vpack.c.b16 %v1086, %v1082
    %v1327 = vpack.c.b16 %v1087, %v1083
    %v1328 = vpack.c.b16 %v1088, %v1084
    %v1329 = vpack.c.b16 %v1093, %v1089
    %v1330 = vpack.c.b16 %v1094, %v1090
    %v1331 = vpack.c.b16 %v1095, %v1091
    %v1332 = vpack.c.b16 %v1096, %v1092
    %v1333 = vpack.c.b16 %v1101, %v1097
    %v1334 = vpack.c.b16 %v1102, %v1098
    %v1335 = vpack.c.b16 %v1103, %v1099
    %v1336 = vpack.c.b16 %v1104, %v1100
    %v1337 = vpack.c.b16 %v1109, %v1105
    %v1338 = vpack.c.b16 %v1110, %v1106
    %v1339 = vpack.c.b16 %v1111, %v1107
    %v1340 = vpack.c.b16 %v1112, %v1108
    %v1341 = vpack.c.b16 %v1117, %v1113
    %v1342 = vpack.c.b16 %v1118, %v1114
    %v1343 = vpack.c.b16 %v1119, %v1115
    %v1344 = vpack.c.b16 %v1120, %v1116
    %v1345 = vpack.c.b16 %v1125, %v1121
    %v1346 = vpack.c.b16 %v1126, %v1122
    %v1347 = vpack.c.b16 %v1127, %v1123
    %v1348 = vpack.c.b16 %v1128, %v1124
    %v1349 = vpack.c.b16 %v1133, %v1129
    %v1350 = vpack.c.b16 %v1134, %v1130
    %v1351 = vpack.c.b16 %v1135, %v1131
    %v1352 = vpack.c.b16 %v1136, %v1132
    %v1353 = vpack.c.b16 %v1141, %v1137
    %v1354 = vpack.c.b16 %v1142, %v1138
    %v1355 = vpack.c.b16 %v1143, %v1139
    %v1356 = vpack.c.b16 %v1144, %v1140
    %v1357 = vpack.c.b16 %v1149, %v1145
    %v1358 = vpack.c.b16 %v1150, %v1146
    %v1359 = vpack.c.b16 %v1151, %v1147
    %v1360 = vpack.c.b16 %v1152, %v1148
    %v1361 = vpack.c.b16 %v1157, %v1153
    %v1362 = vpack.c.b16 %v1158, %v1154
    %v1363 = vpack.c.b16 %v1159, %v1155
    %v1364 = vpack.c.b16 %v1160, %v1156
    %v1365 = vpack.c.b16 %v1165, %v1161
    %v1366 = vpack.c.b16 %v1166, %v1162
    %v1367 = vpack.c.b16 %v1167, %v1163
    %v1368 = vpack.c.b16 %v1168, %v1164
    %v1369 = vpack.c.b16 %v1173, %v1169
    %v1370 = vpack.c.b16 %v1174, %v1170
    %v1371 = vpack.c.b16 %v1175, %v1171
    %v1372 = vpack.c.b16 %v1176, %v1172
    %v1373 = vpack.c.b16 %v1181, %v1177
    %v1374 = vpack.c.b16 %v1182, %v1178
    %v1375 = vpack.c.b16 %v1183, %v1179
    %v1376 = vpack.c.b16 %v1184, %v1180
    %v1377 = vpack.c.b16 %v1189, %v1185
    %v1378 = vpack.c.b16 %v1190, %v1186
    %v1379 = vpack.c.b16 %v1191, %v1187
    %v1380 = vpack.c.b16 %v1192, %v1188
    %v1381 = vpack.c.b16 %v1197, %v1193
    %v1382 = vpack.c.b16 %v1198, %v1194
    %v1383 = vpack.c.b16 %v1199, %v1195
    %v1384 = vpack.c.b16 %v1200, %v1196
    %v1385 = vpack.c.b16 %v1205, %v1201
    %v1386 = vpack.c.b16 %v1206, %v1202
    %v1387 = vpack.c.b16 %v1207, %v1203
    %v1388 = vpack.c.b16 %v1208, %v1204
    %v1389 = vpack.c.b16 %v1213, %v1209
    %v1390 = vpack.c.b16 %v1214, %v1210
    %v1391 = vpack.c.b16 %v1215, %v1211
    %v1392 = vpack.c.b16 %v1216, %v1212
    %v1393 = vpack.c.b16 %v1221, %v1217
    %v1394 = vpack.c.b16 %v1222, %v1218
    %v1395 = vpack.c.b16 %v1223, %v1219
    %v1396 = vpack.c.b16 %v1224, %v1220
    %v1397 = vpack.c.b16 %v1229, %v1225
    %v1398 = vpack.c.b16 %v1230, %v1226
    %v1399 = vpack.c.b16 %v1231, %v1227
    %v1400 = vpack.c.b16 %v1232, %v1228
    %v1401 = vpack.c.b16 %v1237, %v1233
    %v1402 = vpack.c.b16 %v1238, %v1234
    %v1403 = vpack.c.b16 %v1239, %v1235
    %v1404 = vpack.c.b16 %v1240, %v1236
    %v1405 = vpack.c.b16 %v1245, %v1241
    %v1406 = vpack.c.b16 %v1246, %v1242
    %v1407 = vpack.c.b16 %v1247, %v1243
    %v1408 = vpack.c.b16 %v1248, %v1244
    %v1409 = vpack.c.b16 %v1253, %v1249
    %v1410 = vpack.c.b16 %v1254, %v1250
    %v1411 = vpack.c.b16 %v1255, %v1251
    %v1412 = vpack.c.b16 %v1256, %v1252
    %v1413 = vpack.c.b16 %v1261, %v1257
    %v1414 = vpack.c.b16 %v1262, %v1258
    %v1415 = vpack.c.b16 %v1263, %v1259
    %v1416 = vpack.c.b16 %v1264, %v1260
    %v1417 = vpack.c.b16 %v1269, %v1265
    %v1418 = vpack.c.b16 %v1270, %v1266
    %v1419 = vpack.c.b16 %v1271, %v1267
    %v1420 = vpack.c.b16 %v1272, %v1268
    %v1421 = vpack.c.b16 %v1277, %v1273
    %v1422 = vpack.c.b16 %v1278, %v1274
    %v1423 = vpack.c.b16 %v1279, %v1275
    %v1424 = vpack.c.b16 %v1280, %v1276
    %v1425 = vpack.c.b16 %v1285, %v1281
    %v1426 = vpack.c.b16 %v1286, %v1282
    %v1427 = vpack.c.b16 %v1287, %v1283
    %v1428 = vpack.c.b16 %v1288, %v1284
    %v1429 = vpack.c.b16 %v1293, %v1289
    %v1430 = vpack.c.b16 %v1294, %v1290
    %v1431 = vpack.c.b16 %v1295, %v1291
    %v1432 = vpack.c.b16 %v1296, %v1292
    %v1433 = vpack.c.b16 %v1301, %v1297
    %v1434 = vpack.c.b16 %v1302, %v1298
    %v1435 = vpack.c.b16 %v1303, %v1299
    %v1436 = vpack.c.b16 %v1304, %v1300
    %v1437 = vpack.c.b16 %v1309, %v1305
    %v1438 = vpack.c.b16 %v1310, %v1306
    %v1439 = vpack.c.b16 %v1311, %v1307
    %v1440 = vpack.c.b16 %v1312, %v1308
    %1569 = vmatprep.subr.bf16.mxu0 %v1314
    %1570 = vmatpush1.bf16.msra.mxu0 %v1313
    %1571 = vmatprep.subr.bf16.mxu0 %v1318
    %1572 = vmatpush1.bf16.msra.mxu0 %v1317
    %1573 = vmatprep.subr.bf16.mxu0 %v1322
    %1574 = vmatpush1.bf16.msra.mxu0 %v1321
    %1575 = vmatprep.subr.bf16.mxu0 %v1326
    %1576 = vmatpush1.bf16.msra.mxu0 %v1325
    %1577 = vmatprep.subr.bf16.mxu0 %v1330
    %1578 = vmatpush1.bf16.msra.mxu0 %v1329
    %1579 = vmatprep.subr.bf16.mxu0 %v1334
    %1580 = vmatpush1.bf16.msra.mxu0 %v1333
    %1581 = vmatprep.subr.bf16.mxu0 %v1338
    %1582 = vmatpush1.bf16.msra.mxu0 %v1337
    %1583 = vmatprep.subr.bf16.mxu0 %v1342
    %1584 = vmatpush1.bf16.msra.mxu0 %v1341
    %1585 = vmatprep.subr.bf16.mxu0 %v1346
    %1586 = vmatpush1.bf16.msra.mxu0 %v1345
    %1587 = vmatprep.subr.bf16.mxu0 %v1350
    %1588 = vmatpush1.bf16.msra.mxu0 %v1349
    %1589 = vmatprep.subr.bf16.mxu0 %v1354
    %1590 = vmatpush1.bf16.msra.mxu0 %v1353
    %1591 = vmatprep.subr.bf16.mxu0 %v1358
    %1592 = vmatpush1.bf16.msra.mxu0 %v1357
    %1593 = vmatprep.subr.bf16.mxu0 %v1362
    %1594 = vmatpush1.bf16.msra.mxu0 %v1361
    %1595 = vmatprep.subr.bf16.mxu0 %v1366
    %1596 = vmatpush1.bf16.msra.mxu0 %v1365
    %1597 = vmatprep.subr.bf16.mxu0 %v1370
    %1598 = vmatpush1.bf16.msra.mxu0 %v1369
    %1599 = vmatprep.subr.bf16.mxu0 %v1374
    %1600 = vmatpush1.bf16.msra.mxu0 %v1373
    %1601 = vmatprep.mubr.bf16.mxu0 %v776
    %1602 = vmatmul.mubr.bf16.gmra.mrb[0].mxu0 %v775
    %v1603 = vpop.f32.mrb[0].mxu0
    %v1604 = vadd.f32 %v912, %v1603
    %v1605 = vpop.f32.mrb[0].mxu0
    %v1606 = vadd.f32 %v916, %v1605
    %v1607 = vpop.f32.mrb[0].mxu0
    %v1608 = vpop.f32.mrb[0].mxu0
    %1609 = vdwg.mxu0
    %1610 = vmatprep.subr.bf16.mxu0 %v1378
    %1611 = vmatpush1.bf16.msra.mxu0 %v1377
    %1612 = vmatprep.subr.bf16.mxu0 %v1382
    %1613 = vmatpush1.bf16.msra.mxu0 %v1381
    %1614 = vmatprep.subr.bf16.mxu0 %v1386
    %1615 = vmatpush1.bf16.msra.mxu0 %v1385
    %1616 = vmatprep.subr.bf16.mxu0 %v1390
    %1617 = vmatpush1.bf16.msra.mxu0 %v1389
    %1618 = vmatprep.subr.bf16.mxu0 %v1394
    %1619 = vmatpush1.bf16.msra.mxu0 %v1393
    %1620 = vmatprep.subr.bf16.mxu0 %v1398
    %1621 = vmatpush1.bf16.msra.mxu0 %v1397
    %1622 = vmatprep.subr.bf16.mxu0 %v1402
    %1623 = vmatpush1.bf16.msra.mxu0 %v1401
    %1624 = vmatprep.subr.bf16.mxu0 %v1406
    %1625 = vmatpush1.bf16.msra.mxu0 %v1405
    %1626 = vmatprep.subr.bf16.mxu0 %v1410
    %1627 = vmatpush1.bf16.msra.mxu0 %v1409
    %1628 = vmatprep.subr.bf16.mxu0 %v1414
    %1629 = vmatpush1.bf16.msra.mxu0 %v1413
    %1630 = vmatprep.subr.bf16.mxu0 %v1418
    %1631 = vmatpush1.bf16.msra.mxu0 %v1417
    %1632 = vmatprep.subr.bf16.mxu0 %v1422
    %1633 = vmatpush1.bf16.msra.mxu0 %v1421
    %1634 = vmatprep.subr.bf16.mxu0 %v1426
    %1635 = vmatpush1.bf16.msra.mxu0 %v1425
    %1636 = vmatprep.subr.bf16.mxu0 %v1430
    %1637 = vmatpush1.bf16.msra.mxu0 %v1429
    %1638 = vmatprep.subr.bf16.mxu0 %v1434
    %1639 = vmatpush1.bf16.msra.mxu0 %v1433
    %1640 = vmatprep.subr.bf16.mxu0 %v1438
    %1641 = vmatpush1.bf16.msra.mxu0 %v1437
    %1642 = vmatprep.mubr.bf16.mxu0 %v778
    %1643 = vmatmul.mubr.bf16.gmra.mrb[0].mxu0 %v777
    %v1644 = vpop.f32.mrb[0].mxu0
    %v1645 = vadd.f32 %v1604, %v1644
    %v1646 = vpop.f32.mrb[0].mxu0
    %v1647 = vadd.f32 %v1606, %v1646
    %v1648 = vpop.f32.mrb[0].mxu0
    %v1649 = vpop.f32.mrb[0].mxu0
    %1650 = vdwg.mxu0
    %1651 = vmatprep.subr.bf16.mxu0 %v1316
    %1652 = vmatpush1.bf16.msra.mxu0 %v1315
    %1653 = vmatprep.subr.bf16.mxu0 %v1320
    %1654 = vmatpush1.bf16.msra.mxu0 %v1319
    %1655 = vmatprep.subr.bf16.mxu0 %v1324
    %1656 = vmatpush1.bf16.msra.mxu0 %v1323
    %1657 = vmatprep.subr.bf16.mxu0 %v1328
    %1658 = vmatpush1.bf16.msra.mxu0 %v1327
    %1659 = vmatprep.subr.bf16.mxu0 %v1332
    %1660 = vmatpush1.bf16.msra.mxu0 %v1331
    %1661 = vmatprep.subr.bf16.mxu0 %v1336
    %1662 = vmatpush1.bf16.msra.mxu0 %v1335
    %1663 = vmatprep.subr.bf16.mxu0 %v1340
    %1664 = vmatpush1.bf16.msra.mxu0 %v1339
    %1665 = vmatprep.subr.bf16.mxu0 %v1344
    %1666 = vmatpush1.bf16.msra.mxu0 %v1343
    %1667 = vmatprep.subr.bf16.mxu0 %v1348
    %1668 = vmatpush1.bf16.msra.mxu0 %v1347
    %1669 = vmatprep.subr.bf16.mxu0 %v1352
    %1670 = vmatpush1.bf16.msra.mxu0 %v1351
    %1671 = vmatprep.subr.bf16.mxu0 %v1356
    %1672 = vmatpush1.bf16.msra.mxu0 %v1355
    %1673 = vmatprep.subr.bf16.mxu0 %v1360
    %1674 = vmatpush1.bf16.msra.mxu0 %v1359
    %1675 = vmatprep.subr.bf16.mxu0 %v1364
    %1676 = vmatpush1.bf16.msra.mxu0 %v1363
    %1677 = vmatprep.subr.bf16.mxu0 %v1368
    %1678 = vmatpush1.bf16.msra.mxu0 %v1367
    %1679 = vmatprep.subr.bf16.mxu0 %v1372
    %1680 = vmatpush1.bf16.msra.mxu0 %v1371
    %1681 = vmatprep.subr.bf16.mxu0 %v1376
    %1682 = vmatpush1.bf16.msra.mxu0 %v1375
    %1683 = vmatprep.mubr.bf16.mxu0 %v776
    %1684 = vmatmul.mubr.bf16.gmra.mrb[0].mxu0 %v775
    %v1685 = vpop.f32.mrb[0].mxu0
    %v1686 = vadd.f32 %v920, %v1685
    %v1687 = vpop.f32.mrb[0].mxu0
    %v1688 = vadd.f32 %v924, %v1687
    %v1689 = vpop.f32.mrb[0].mxu0
    %v1690 = vpop.f32.mrb[0].mxu0
    %1691 = vdwg.mxu0
    %1692 = vmatprep.subr.bf16.mxu0 %v1380
    %1693 = vmatpush1.bf16.msra.mxu0 %v1379
    %1694 = vmatprep.subr.bf16.mxu0 %v1384
    %1695 = vmatpush1.bf16.msra.mxu0 %v1383
    %1696 = vmatprep.subr.bf16.mxu0 %v1388
    %1697 = vmatpush1.bf16.msra.mxu0 %v1387
    %1698 = vmatprep.subr.bf16.mxu0 %v1392
    %1699 = vmatpush1.bf16.msra.mxu0 %v1391
    %1700 = vmatprep.subr.bf16.mxu0 %v1396
    %1701 = vmatpush1.bf16.msra.mxu0 %v1395
    %1702 = vmatprep.subr.bf16.mxu0 %v1400
    %1703 = vmatpush1.bf16.msra.mxu0 %v1399
    %1704 = vmatprep.subr.bf16.mxu0 %v1404
    %1705 = vmatpush1.bf16.msra.mxu0 %v1403
    %1706 = vmatprep.subr.bf16.mxu0 %v1408
    %1707 = vmatpush1.bf16.msra.mxu0 %v1407
    %1708 = vmatprep.subr.bf16.mxu0 %v1412
    %1709 = vmatpush1.bf16.msra.mxu0 %v1411
    %1710 = vmatprep.subr.bf16.mxu0 %v1416
    %1711 = vmatpush1.bf16.msra.mxu0 %v1415
    %1712 = vmatprep.subr.bf16.mxu0 %v1420
    %1713 = vmatpush1.bf16.msra.mxu0 %v1419
    %1714 = vmatprep.subr.bf16.mxu0 %v1424
    %1715 = vmatpush1.bf16.msra.mxu0 %v1423
    %1716 = vmatprep.subr.bf16.mxu0 %v1428
    %1717 = vmatpush1.bf16.msra.mxu0 %v1427
    %1718 = vmatprep.subr.bf16.mxu0 %v1432
    %1719 = vmatpush1.bf16.msra.mxu0 %v1431
    %1720 = vmatprep.subr.bf16.mxu0 %v1436
    %1721 = vmatpush1.bf16.msra.mxu0 %v1435
    %1722 = vmatprep.subr.bf16.mxu0 %v1440
    %1723 = vmatpush1.bf16.msra.mxu0 %v1439
    %1724 = vmatprep.mubr.bf16.mxu0 %v778
    %1725 = vmatmul.mubr.bf16.gmra.mrb[0].mxu0 %v777
    %v1726 = vpop.f32.mrb[0].mxu0
    %v1727 = vadd.f32 %v1686, %v1726
    %v1728 = vpop.f32.mrb[0].mxu0
    %v1729 = vadd.f32 %v1688, %v1728
    %v1730 = vpop.f32.mrb[0].mxu0
    %v1731 = vpop.f32.mrb[0].mxu0
    %1732 = vdwg.mxu0
    %v1733 = vld [vmem:[%s9] sm:$0xf]
    %v1734 = vld [vmem:[%s10] sm:$0xf]
    %v1735 = vadd.f32 %v1645, %v1647
    %v1736 = vadd.f32 %v1735, %v1727
    %v1737 = vadd.f32 %v1736, %v1729
    %1738 = vadd.xlane.f32.xlu0 %v1737
    %v1739 = vpop.xlane.xlu0 %1738
    %v1740 = vmul.f32 %v1645, %v1645
    %v1741 = vmul.f32 %v1647, %v1647
    %v1742 = vmul.f32 %v1727, %v1727
    %v1743 = vmul.f32 %v1729, %v1729
    %v1744 = vadd.f32 %v1740, %v1741
    %v1745 = vadd.f32 %v1744, %v1742
    %v1746 = vadd.f32 %v1745, %v1743
    %1747 = vadd.xlane.f32.xlu0 %v1746
    %v1748 = vpop.xlane.xlu0 %1747
    %v1749 = vmul.f32 %v1739, 0.001953125
    %v1750 = vmul.f32 %v1748, 0.001953125
    %v1751 = vmul.f32 %v1749, %v1749
    %v1752 = vsub.f32 %v1750, %v1751
    %v1753 = vmax.f32 %v1752, 0.0
    %v1754 = vsub.f32 %v1645, %v1749
    %v1755 = vsub.f32 %v1647, %v1749
    %v1756 = vsub.f32 %v1727, %v1749
    %v1757 = vsub.f32 %v1729, %v1749
    %v1758 = vadd.f32 %v1753, 1e-05
    %v1759 = vrsqrt.pop %v1758
    %v1760 = vmul.f32 %v1754, %v1759
    %v1761 = vmul.f32 %v1755, %v1759
    %v1762 = vmul.f32 %v1756, %v1759
    %v1763 = vmul.f32 %v1757, %v1759
    %v1765 = vlaneseq
    %v1766 = vshrl.u32 %v1765, 7
    %v1767 = vsub.s32 0, %v1766
    %v1768 = vrot.slane %v1733, %v1767
    %v1769 = vlaneseq
    %v1770 = vshrl.u32 %v1769, 7
    %v1771 = vsub.s32 1, %v1770
    %v1772 = vrot.slane %v1733, %v1771
    %v1773 = vlaneseq
    %v1774 = vshrl.u32 %v1773, 7
    %v1775 = vsub.s32 2, %v1774
    %v1776 = vrot.slane %v1733, %v1775
    %v1777 = vlaneseq
    %v1778 = vshrl.u32 %v1777, 7
    %v1779 = vsub.s32 3, %v1778
    %v1780 = vrot.slane %v1733, %v1779
    %v1785 = vmul.f32 %v1760, %v1768
    %v1786 = vmul.f32 %v1761, %v1772
    %v1787 = vmul.f32 %v1762, %v1776
    %v1788 = vmul.f32 %v1763, %v1780
    %v1790 = vlaneseq
    %v1791 = vshrl.u32 %v1790, 7
    %v1792 = vsub.s32 0, %v1791
    %v1793 = vrot.slane %v1734, %v1792
    %v1794 = vlaneseq
    %v1795 = vshrl.u32 %v1794, 7
    %v1796 = vsub.s32 1, %v1795
    %v1797 = vrot.slane %v1734, %v1796
    %v1798 = vlaneseq
    %v1799 = vshrl.u32 %v1798, 7
    %v1800 = vsub.s32 2, %v1799
    %v1801 = vrot.slane %v1734, %v1800
    %v1802 = vlaneseq
    %v1803 = vshrl.u32 %v1802, 7
    %v1804 = vsub.s32 3, %v1803
    %v1805 = vrot.slane %v1734, %v1804
    %v1810 = vadd.f32 %v1785, %v1793
    %v1811 = vadd.f32 %v1786, %v1797
    %v1812 = vadd.f32 %v1787, %v1801
    %v1813 = vadd.f32 %v1788, %v1805
    %v1814 = vmax.f32 %v1810, 0.0
    %v1815 = vmax.f32 %v1811, 0.0
    %v1816 = vmax.f32 %v1812, 0.0
    %v1817 = vmax.f32 %v1813, 0.0
    %v1818 = vpack.c.bf16 %v1814, %v1814
    %v1819 = vpack.c.bf16 %v1815, %v1815
    %v1820 = vpack.c.bf16 %v1816, %v1816
    %v1821 = vpack.c.bf16 %v1817, %v1817
    %v1822 = vld [vmem:[#allocation8] sm:$0xff]
    %v1823 = vld [vmem:[#allocation8 + $0x8] sm:$0xff]
    %v1824 = vld [vmem:[#allocation8 + $0x10] sm:$0xff]
    %v1825 = vld [vmem:[#allocation8 + $0x18] sm:$0xff]
    %v1826 = vld [vmem:[#allocation8 + $0x20] sm:$0xff]
    %v1827 = vld [vmem:[#allocation8 + $0x28] sm:$0xff]
    %v1828 = vld [vmem:[#allocation8 + $0x30] sm:$0xff]
    %v1829 = vld [vmem:[#allocation8 + $0x38] sm:$0xff]
    %v1830 = vld [vmem:[#allocation8 + $0x40] sm:$0xff]
    %v1831 = vld [vmem:[#allocation8 + $0x48] sm:$0xff]
    %v1832 = vld [vmem:[#allocation8 + $0x50] sm:$0xff]
    %v1833 = vld [vmem:[#allocation8 + $0x58] sm:$0xff]
    %v1834 = vld [vmem:[#allocation8 + $0x60] sm:$0xff]
    %v1835 = vld [vmem:[#allocation8 + $0x68] sm:$0xff]
    %v1836 = vld [vmem:[#allocation8 + $0x70] sm:$0xff]
    %v1837 = vld [vmem:[#allocation8 + $0x78] sm:$0xff]
    %v1838 = vld [vmem:[#allocation8 + $0x80] sm:$0xff]
    %v1839 = vld [vmem:[#allocation8 + $0x88] sm:$0xff]
    %v1840 = vld [vmem:[#allocation8 + $0x90] sm:$0xff]
    %v1841 = vld [vmem:[#allocation8 + $0x98] sm:$0xff]
    %v1842 = vld [vmem:[#allocation8 + $0xa0] sm:$0xff]
    %v1843 = vld [vmem:[#allocation8 + $0xa8] sm:$0xff]
    %v1844 = vld [vmem:[#allocation8 + $0xb0] sm:$0xff]
    %v1845 = vld [vmem:[#allocation8 + $0xb8] sm:$0xff]
    %v1846 = vld [vmem:[#allocation8 + $0xc0] sm:$0xff]
    %v1847 = vld [vmem:[#allocation8 + $0xc8] sm:$0xff]
    %v1848 = vld [vmem:[#allocation8 + $0xd0] sm:$0xff]
    %v1849 = vld [vmem:[#allocation8 + $0xd8] sm:$0xff]
    %v1850 = vld [vmem:[#allocation8 + $0xe0] sm:$0xff]
    %v1851 = vld [vmem:[#allocation8 + $0xe8] sm:$0xff]
    %v1852 = vld [vmem:[#allocation8 + $0xf0] sm:$0xff]
    %v1853 = vld [vmem:[#allocation8 + $0xf8] sm:$0xff]
    %v1854 = vld [vmem:[#allocation8 + $0x100] sm:$0xff]
    %v1855 = vld [vmem:[#allocation8 + $0x108] sm:$0xff]
    %v1856 = vld [vmem:[#allocation8 + $0x110] sm:$0xff]
    %v1857 = vld [vmem:[#allocation8 + $0x118] sm:$0xff]
    %v1858 = vld [vmem:[#allocation8 + $0x120] sm:$0xff]
    %v1859 = vld [vmem:[#allocation8 + $0x128] sm:$0xff]
    %v1860 = vld [vmem:[#allocation8 + $0x130] sm:$0xff]
    %v1861 = vld [vmem:[#allocation8 + $0x138] sm:$0xff]
    %v1862 = vld [vmem:[#allocation8 + $0x140] sm:$0xff]
    %v1863 = vld [vmem:[#allocation8 + $0x148] sm:$0xff]
    %v1864 = vld [vmem:[#allocation8 + $0x150] sm:$0xff]
    %v1865 = vld [vmem:[#allocation8 + $0x158] sm:$0xff]
    %v1866 = vld [vmem:[#allocation8 + $0x160] sm:$0xff]
    %v1867 = vld [vmem:[#allocation8 + $0x168] sm:$0xff]
    %v1868 = vld [vmem:[#allocation8 + $0x170] sm:$0xff]
    %v1869 = vld [vmem:[#allocation8 + $0x178] sm:$0xff]
    %v1870 = vld [vmem:[#allocation8 + $0x180] sm:$0xff]
    %v1871 = vld [vmem:[#allocation8 + $0x188] sm:$0xff]
    %v1872 = vld [vmem:[#allocation8 + $0x190] sm:$0xff]
    %v1873 = vld [vmem:[#allocation8 + $0x198] sm:$0xff]
    %v1874 = vld [vmem:[#allocation8 + $0x1a0] sm:$0xff]
    %v1875 = vld [vmem:[#allocation8 + $0x1a8] sm:$0xff]
    %v1876 = vld [vmem:[#allocation8 + $0x1b0] sm:$0xff]
    %v1877 = vld [vmem:[#allocation8 + $0x1b8] sm:$0xff]
    %v1878 = vld [vmem:[#allocation8 + $0x1c0] sm:$0xff]
    %v1879 = vld [vmem:[#allocation8 + $0x1c8] sm:$0xff]
    %v1880 = vld [vmem:[#allocation8 + $0x1d0] sm:$0xff]
    %v1881 = vld [vmem:[#allocation8 + $0x1d8] sm:$0xff]
    %v1882 = vld [vmem:[#allocation8 + $0x1e0] sm:$0xff]
    %v1883 = vld [vmem:[#allocation8 + $0x1e8] sm:$0xff]
    %v1884 = vld [vmem:[#allocation8 + $0x1f0] sm:$0xff]
    %v1885 = vld [vmem:[#allocation8 + $0x1f8] sm:$0xff]
    %v1886 = vld [vmem:[%s12] sm:$0x3]
    %v1888 = vlaneseq
    %v1889 = vshrl.u32 %v1888, 7
    %v1890 = vsub.s32 0, %v1889
    %v1891 = vrot.slane %v1886, %v1890
    %v1892 = vlaneseq
    %v1893 = vshrl.u32 %v1892, 7
    %v1894 = vsub.s32 1, %v1893
    %v1895 = vrot.slane %v1886, %v1894
    %v1962 = vunpack.c.l.b16 %v1822
    %v1963 = vunpack.c.h.b16 %v1822
    %v1964 = vunpack.c.l.b16 %v1823
    %v1965 = vunpack.c.h.b16 %v1823
    %v1966 = vunpack.c.l.b16 %v1824
    %v1967 = vunpack.c.h.b16 %v1824
    %v1968 = vunpack.c.l.b16 %v1825
    %v1969 = vunpack.c.h.b16 %v1825
    %v1970 = vunpack.c.l.b16 %v1826
    %v1971 = vunpack.c.h.b16 %v1826
    %v1972 = vunpack.c.l.b16 %v1827
    %v1973 = vunpack.c.h.b16 %v1827
    %v1974 = vunpack.c.l.b16 %v1828
    %v1975 = vunpack.c.h.b16 %v1828
    %v1976 = vunpack.c.l.b16 %v1829
    %v1977 = vunpack.c.h.b16 %v1829
    %v1978 = vunpack.c.l.b16 %v1830
    %v1979 = vunpack.c.h.b16 %v1830
    %v1980 = vunpack.c.l.b16 %v1831
    %v1981 = vunpack.c.h.b16 %v1831
    %v1982 = vunpack.c.l.b16 %v1832
    %v1983 = vunpack.c.h.b16 %v1832
    %v1984 = vunpack.c.l.b16 %v1833
    %v1985 = vunpack.c.h.b16 %v1833
    %v1986 = vunpack.c.l.b16 %v1834
    %v1987 = vunpack.c.h.b16 %v1834
    %v1988 = vunpack.c.l.b16 %v1835
    %v1989 = vunpack.c.h.b16 %v1835
    %v1990 = vunpack.c.l.b16 %v1836
    %v1991 = vunpack.c.h.b16 %v1836
    %v1992 = vunpack.c.l.b16 %v1837
    %v1993 = vunpack.c.h.b16 %v1837
    %v1994 = vunpack.c.l.b16 %v1838
    %v1995 = vunpack.c.h.b16 %v1838
    %v1996 = vunpack.c.l.b16 %v1839
    %v1997 = vunpack.c.h.b16 %v1839
    %v1998 = vunpack.c.l.b16 %v1840
    %v1999 = vunpack.c.h.b16 %v1840
    %v2000 = vunpack.c.l.b16 %v1841
    %v2001 = vunpack.c.h.b16 %v1841
    %v2002 = vunpack.c.l.b16 %v1842
    %v2003 = vunpack.c.h.b16 %v1842
    %v2004 = vunpack.c.l.b16 %v1843
    %v2005 = vunpack.c.h.b16 %v1843
    %v2006 = vunpack.c.l.b16 %v1844
    %v2007 = vunpack.c.h.b16 %v1844
    %v2008 = vunpack.c.l.b16 %v1845
    %v2009 = vunpack.c.h.b16 %v1845
    %v2010 = vunpack.c.l.b16 %v1846
    %v2011 = vunpack.c.h.b16 %v1846
    %v2012 = vunpack.c.l.b16 %v1847
    %v2013 = vunpack.c.h.b16 %v1847
    %v2014 = vunpack.c.l.b16 %v1848
    %v2015 = vunpack.c.h.b16 %v1848
    %v2016 = vunpack.c.l.b16 %v1849
    %v2017 = vunpack.c.h.b16 %v1849
    %v2018 = vunpack.c.l.b16 %v1850
    %v2019 = vunpack.c.h.b16 %v1850
    %v2020 = vunpack.c.l.b16 %v1851
    %v2021 = vunpack.c.h.b16 %v1851
    %v2022 = vunpack.c.l.b16 %v1852
    %v2023 = vunpack.c.h.b16 %v1852
    %v2024 = vunpack.c.l.b16 %v1853
    %v2025 = vunpack.c.h.b16 %v1853
    %v2026 = vunpack.c.l.b16 %v1854
    %v2027 = vunpack.c.h.b16 %v1854
    %v2028 = vunpack.c.l.b16 %v1855
    %v2029 = vunpack.c.h.b16 %v1855
    %v2030 = vunpack.c.l.b16 %v1856
    %v2031 = vunpack.c.h.b16 %v1856
    %v2032 = vunpack.c.l.b16 %v1857
    %v2033 = vunpack.c.h.b16 %v1857
    %v2034 = vunpack.c.l.b16 %v1858
    %v2035 = vunpack.c.h.b16 %v1858
    %v2036 = vunpack.c.l.b16 %v1859
    %v2037 = vunpack.c.h.b16 %v1859
    %v2038 = vunpack.c.l.b16 %v1860
    %v2039 = vunpack.c.h.b16 %v1860
    %v2040 = vunpack.c.l.b16 %v1861
    %v2041 = vunpack.c.h.b16 %v1861
    %v2042 = vunpack.c.l.b16 %v1862
    %v2043 = vunpack.c.h.b16 %v1862
    %v2044 = vunpack.c.l.b16 %v1863
    %v2045 = vunpack.c.h.b16 %v1863
    %v2046 = vunpack.c.l.b16 %v1864
    %v2047 = vunpack.c.h.b16 %v1864
    %v2048 = vunpack.c.l.b16 %v1865
    %v2049 = vunpack.c.h.b16 %v1865
    %v2050 = vunpack.c.l.b16 %v1866
    %v2051 = vunpack.c.h.b16 %v1866
    %v2052 = vunpack.c.l.b16 %v1867
    %v2053 = vunpack.c.h.b16 %v1867
    %v2054 = vunpack.c.l.b16 %v1868
    %v2055 = vunpack.c.h.b16 %v1868
    %v2056 = vunpack.c.l.b16 %v1869
    %v2057 = vunpack.c.h.b16 %v1869
    %v2058 = vunpack.c.l.b16 %v1870
    %v2059 = vunpack.c.h.b16 %v1870
    %v2060 = vunpack.c.l.b16 %v1871
    %v2061 = vunpack.c.h.b16 %v1871
    %v2062 = vunpack.c.l.b16 %v1872
    %v2063 = vunpack.c.h.b16 %v1872
    %v2064 = vunpack.c.l.b16 %v1873
    %v2065 = vunpack.c.h.b16 %v1873
    %v2066 = vunpack.c.l.b16 %v1874
    %v2067 = vunpack.c.h.b16 %v1874
    %v2068 = vunpack.c.l.b16 %v1875
    %v2069 = vunpack.c.h.b16 %v1875
    %v2070 = vunpack.c.l.b16 %v1876
    %v2071 = vunpack.c.h.b16 %v1876
    %v2072 = vunpack.c.l.b16 %v1877
    %v2073 = vunpack.c.h.b16 %v1877
    %v2074 = vunpack.c.l.b16 %v1878
    %v2075 = vunpack.c.h.b16 %v1878
    %v2076 = vunpack.c.l.b16 %v1879
    %v2077 = vunpack.c.h.b16 %v1879
    %v2078 = vunpack.c.l.b16 %v1880
    %v2079 = vunpack.c.h.b16 %v1880
    %v2080 = vunpack.c.l.b16 %v1881
    %v2081 = vunpack.c.h.b16 %v1881
    %v2082 = vunpack.c.l.b16 %v1882
    %v2083 = vunpack.c.h.b16 %v1882
    %v2084 = vunpack.c.l.b16 %v1883
    %v2085 = vunpack.c.h.b16 %v1883
    %v2086 = vunpack.c.l.b16 %v1884
    %v2087 = vunpack.c.h.b16 %v1884
    %v2088 = vunpack.c.l.b16 %v1885
    %v2089 = vunpack.c.h.b16 %v1885
    %v2090 = vpack.c.b16 %v1964, %v1962
    %v2091 = vpack.c.b16 %v1965, %v1963
    %v2092 = vpack.c.b16 %v1968, %v1966
    %v2093 = vpack.c.b16 %v1969, %v1967
    %v2094 = vpack.c.b16 %v1972, %v1970
    %v2095 = vpack.c.b16 %v1973, %v1971
    %v2096 = vpack.c.b16 %v1976, %v1974
    %v2097 = vpack.c.b16 %v1977, %v1975
    %v2098 = vpack.c.b16 %v1980, %v1978
    %v2099 = vpack.c.b16 %v1981, %v1979
    %v2100 = vpack.c.b16 %v1984, %v1982
    %v2101 = vpack.c.b16 %v1985, %v1983
    %v2102 = vpack.c.b16 %v1988, %v1986
    %v2103 = vpack.c.b16 %v1989, %v1987
    %v2104 = vpack.c.b16 %v1992, %v1990
    %v2105 = vpack.c.b16 %v1993, %v1991
    %v2106 = vpack.c.b16 %v1996, %v1994
    %v2107 = vpack.c.b16 %v1997, %v1995
    %v2108 = vpack.c.b16 %v2000, %v1998
    %v2109 = vpack.c.b16 %v2001, %v1999
    %v2110 = vpack.c.b16 %v2004, %v2002
    %v2111 = vpack.c.b16 %v2005, %v2003
    %v2112 = vpack.c.b16 %v2008, %v2006
    %v2113 = vpack.c.b16 %v2009, %v2007
    %v2114 = vpack.c.b16 %v2012, %v2010
    %v2115 = vpack.c.b16 %v2013, %v2011
    %v2116 = vpack.c.b16 %v2016, %v2014
    %v2117 = vpack.c.b16 %v2017, %v2015
    %v2118 = vpack.c.b16 %v2020, %v2018
    %v2119 = vpack.c.b16 %v2021, %v2019
    %v2120 = vpack.c.b16 %v2024, %v2022
    %v2121 = vpack.c.b16 %v2025, %v2023
    %v2122 = vpack.c.b16 %v2028, %v2026
    %v2123 = vpack.c.b16 %v2029, %v2027
    %v2124 = vpack.c.b16 %v2032, %v2030
    %v2125 = vpack.c.b16 %v2033, %v2031
    %v2126 = vpack.c.b16 %v2036, %v2034
    %v2127 = vpack.c.b16 %v2037, %v2035
    %v2128 = vpack.c.b16 %v2040, %v2038
    %v2129 = vpack.c.b16 %v2041, %v2039
    %v2130 = vpack.c.b16 %v2044, %v2042
    %v2131 = vpack.c.b16 %v2045, %v2043
    %v2132 = vpack.c.b16 %v2048, %v2046
    %v2133 = vpack.c.b16 %v2049, %v2047
    %v2134 = vpack.c.b16 %v2052, %v2050
    %v2135 = vpack.c.b16 %v2053, %v2051
    %v2136 = vpack.c.b16 %v2056, %v2054
    %v2137 = vpack.c.b16 %v2057, %v2055
    %v2138 = vpack.c.b16 %v2060, %v2058
    %v2139 = vpack.c.b16 %v2061, %v2059
    %v2140 = vpack.c.b16 %v2064, %v2062
    %v2141 = vpack.c.b16 %v2065, %v2063
    %v2142 = vpack.c.b16 %v2068, %v2066
    %v2143 = vpack.c.b16 %v2069, %v2067
    %v2144 = vpack.c.b16 %v2072, %v2070
    %v2145 = vpack.c.b16 %v2073, %v2071
    %v2146 = vpack.c.b16 %v2076, %v2074
    %v2147 = vpack.c.b16 %v2077, %v2075
    %v2148 = vpack.c.b16 %v2080, %v2078
    %v2149 = vpack.c.b16 %v2081, %v2079
    %v2150 = vpack.c.b16 %v2084, %v2082
    %v2151 = vpack.c.b16 %v2085, %v2083
    %v2152 = vpack.c.b16 %v2088, %v2086
    %v2153 = vpack.c.b16 %v2089, %v2087
    %2218 = vmatprep.subr.bf16.mxu0 %v2091
    %2219 = vmatpush1.bf16.msra.mxu0 %v2090
    %2220 = vmatprep.subr.bf16.mxu0 %v2093
    %2221 = vmatpush1.bf16.msra.mxu0 %v2092
    %2222 = vmatprep.subr.bf16.mxu0 %v2095
    %2223 = vmatpush1.bf16.msra.mxu0 %v2094
    %2224 = vmatprep.subr.bf16.mxu0 %v2097
    %2225 = vmatpush1.bf16.msra.mxu0 %v2096
    %2226 = vmatprep.subr.bf16.mxu0 %v2099
    %2227 = vmatpush1.bf16.msra.mxu0 %v2098
    %2228 = vmatprep.subr.bf16.mxu0 %v2101
    %2229 = vmatpush1.bf16.msra.mxu0 %v2100
    %2230 = vmatprep.subr.bf16.mxu0 %v2103
    %2231 = vmatpush1.bf16.msra.mxu0 %v2102
    %2232 = vmatprep.subr.bf16.mxu0 %v2105
    %2233 = vmatpush1.bf16.msra.mxu0 %v2104
    %2234 = vmatprep.subr.bf16.mxu0 %v2107
    %2235 = vmatpush1.bf16.msra.mxu0 %v2106
    %2236 = vmatprep.subr.bf16.mxu0 %v2109
    %2237 = vmatpush1.bf16.msra.mxu0 %v2108
    %2238 = vmatprep.subr.bf16.mxu0 %v2111
    %2239 = vmatpush1.bf16.msra.mxu0 %v2110
    %2240 = vmatprep.subr.bf16.mxu0 %v2113
    %2241 = vmatpush1.bf16.msra.mxu0 %v2112
    %2242 = vmatprep.subr.bf16.mxu0 %v2115
    %2243 = vmatpush1.bf16.msra.mxu0 %v2114
    %2244 = vmatprep.subr.bf16.mxu0 %v2117
    %2245 = vmatpush1.bf16.msra.mxu0 %v2116
    %2246 = vmatprep.subr.bf16.mxu0 %v2119
    %2247 = vmatpush1.bf16.msra.mxu0 %v2118
    %2248 = vmatprep.subr.bf16.mxu0 %v2121
    %2249 = vmatpush1.bf16.msra.mxu0 %v2120
    %2250 = vmatprep.mubr.bf16.mxu0 %v1819
    %2251 = vmatmul.mubr.bf16.gmra.mrb[0].mxu0 %v1818
    %v2252 = vpop.f32.mrb[0].mxu0
    %v2253 = vadd.f32 %v1891, %v2252
    %v2254 = vpop.f32.mrb[0].mxu0
    %v2255 = vadd.f32 %v1895, %v2254
    %v2256 = vpop.f32.mrb[0].mxu0
    %v2257 = vpop.f32.mrb[0].mxu0
    %2258 = vdwg.mxu0
    %2259 = vmatprep.subr.bf16.mxu0 %v2123
    %2260 = vmatpush1.bf16.msra.mxu0 %v2122
    %2261 = vmatprep.subr.bf16.mxu0 %v2125
    %2262 = vmatpush1.bf16.msra.mxu0 %v2124
    %2263 = vmatprep.subr.bf16.mxu0 %v2127
    %2264 = vmatpush1.bf16.msra.mxu0 %v2126
    %2265 = vmatprep.subr.bf16.mxu0 %v2129
    %2266 = vmatpush1.bf16.msra.mxu0 %v2128
    %2267 = vmatprep.subr.bf16.mxu0 %v2131
    %2268 = vmatpush1.bf16.msra.mxu0 %v2130
    %2269 = vmatprep.subr.bf16.mxu0 %v2133
    %2270 = vmatpush1.bf16.msra.mxu0 %v2132
    %2271 = vmatprep.subr.bf16.mxu0 %v2135
    %2272 = vmatpush1.bf16.msra.mxu0 %v2134
    %2273 = vmatprep.subr.bf16.mxu0 %v2137
    %2274 = vmatpush1.bf16.msra.mxu0 %v2136
    %2275 = vmatprep.subr.bf16.mxu0 %v2139
    %2276 = vmatpush1.bf16.msra.mxu0 %v2138
    %2277 = vmatprep.subr.bf16.mxu0 %v2141
    %2278 = vmatpush1.bf16.msra.mxu0 %v2140
    %2279 = vmatprep.subr.bf16.mxu0 %v2143
    %2280 = vmatpush1.bf16.msra.mxu0 %v2142
    %2281 = vmatprep.subr.bf16.mxu0 %v2145
    %2282 = vmatpush1.bf16.msra.mxu0 %v2144
    %2283 = vmatprep.subr.bf16.mxu0 %v2147
    %2284 = vmatpush1.bf16.msra.mxu0 %v2146
    %2285 = vmatprep.subr.bf16.mxu0 %v2149
    %2286 = vmatpush1.bf16.msra.mxu0 %v2148
    %2287 = vmatprep.subr.bf16.mxu0 %v2151
    %2288 = vmatpush1.bf16.msra.mxu0 %v2150
    %2289 = vmatprep.subr.bf16.mxu0 %v2153
    %2290 = vmatpush1.bf16.msra.mxu0 %v2152
    %2291 = vmatprep.mubr.bf16.mxu0 %v1821
    %2292 = vmatmul.mubr.bf16.gmra.mrb[0].mxu0 %v1820
    %v2293 = vpop.f32.mrb[0].mxu0
    %v2294 = vadd.f32 %v2253, %v2293
    %v2295 = vpop.f32.mrb[0].mxu0
    %v2296 = vadd.f32 %v2255, %v2295
    %v2297 = vpop.f32.mrb[0].mxu0
    %v2298 = vpop.f32.mrb[0].mxu0
    %2299 = vdwg.mxu0
    %2300 = vst [vmem:[#allocation10] sm:$0xff] %v2294
    %2301 = vst [vmem:[#allocation10 + $0x8] sm:$0xff] %v2296
    // Predicated region
    $region70: #{tpu_custom_call.1} parent=1 // pred_check
      _
    $region71: #{tpu_custom_call.1} parent=1 // pred_check_branch
      %2303 = sbr.rel (0) target = $region73
    $region72: #{tpu_custom_call.1} parent=1 // pred_region
      %s2305 = ssub.s32 256, 256
      %2306 = vsyncadd [#allocation4], %s2305
      %s2308 = sshll.u32 [#allocation10], 4
      %s2309 = int_to_ptr.vmem [resolvable:$true] %s2308
      %2311 = dma.vmem_to_hbm [thread:$0]  %s2309, 256, %s13, [#allocation4]
    $region73: #{tpu_custom_call.1} parent=1 // pred_fallthru
      _
    // Predicated region
    $region74: #{tpu_custom_call.1} parent=1 // pred_check
      _
    $region75: #{tpu_custom_call.1} parent=1 // pred_check_branch
      %2313 = sbr.rel (0) target = $region77
    $region76: #{tpu_custom_call.1} parent=1 // pred_region
      %2314 = dma.done [#allocation4], 256
    $region77: #{tpu_custom_call.1} parent=1 // pred_fallthru
      _
    %2315 = vsyncpa [#allocation3], 1
    %2316 = vsyncpa [#allocation6], 1
    %2317 = vsyncpa [#allocation9], 1
    %2318 = vsyncpa [#allocation4], 1

</llo_original>
